<compile_context>
chip_gen: v7x
topology: tpu7x:2x2x1
jax: 0.10.0
libtpu: 0.0.40
codegen_flags: <defaults>
</compile_context>

<pallas_src>
import functools

import jax
import jax.numpy as jnp
from jax.experimental import pallas as pl
from jax.experimental.pallas import tpu as pltpu


def xt_attention_kernel(words_ref, pos_ref, con_ref,
                        ww_ref, wp_ref, wc_ref, wo_ref, bo_ref,
                        out_ref, ho_ref,
                        *, num_heads, head_dim, bt, n,
                        compute_dtype, exp_dtype, approx_recip):
    dim = out_ref.shape[-1]
    inner = num_heads * head_dim
    m = bt * n
    cd = compute_dtype

    dot = functools.partial(jnp.dot, preferred_element_type=jnp.float32)

    # Flatten the batch tile to (Bt*N, dim).
    words = words_ref[...].reshape(m, dim).astype(cd)
    pos = pos_ref[...].reshape(m, dim).astype(cd)
    con = con_ref[...].reshape(m, dim).astype(cd)

    # Projections: V rides in the words GEMM; pos/con add into the QK columns.
    qkv_w = dot(words, ww_ref[...])                       # (M, 3*inner) f32
    qk = (qkv_w[:, :2 * inner]
          + dot(pos, wp_ref[...])
          + dot(con, wc_ref[...]))                        # (M, 2*inner) f32

    q3 = qk[:, :inner].reshape(bt, n, inner).astype(cd)   # scale pre-folded into Wq
    k3 = qk[:, inner:].reshape(bt, n, inner).astype(cd)
    v3 = qkv_w[:, 2 * inner:].reshape(bt, n, inner).astype(cd)

    # Per-head attention, batched over Bt with 3-D einsums contracting on the
    # lane axis.  Head outputs land at their lane offset in the (M, inner)
    # scratch so the output projection is a single GEMM afterwards.
    for h in range(num_heads):
        sl = slice(h * head_dim, (h + 1) * head_dim)
        qh, kh, vh = q3[:, :, sl], k3[:, :, sl], v3[:, :, sl]     # (Bt, N, D)
        sim = jnp.einsum('bnd,bmd->bnm', qh, kh,
                         preferred_element_type=jnp.float32)       # (Bt, N, N)
        mx = jnp.max(sim, axis=-1, keepdims=True)
        p = jnp.exp((sim - mx).astype(exp_dtype))                  # bf16 EUP on v6e/v7x
        l = jnp.sum(p, axis=-1, keepdims=True, dtype=jnp.float32)  # (Bt, N, 1)
        oh = jnp.einsum('bnm,bmd->bnd', p.astype(cd), vh,
                        preferred_element_type=jnp.float32)        # (Bt, N, D)
        oh = oh * pl.reciprocal(l, approx=approx_recip)            # normalise output
        ho_ref[:, h * head_dim:(h + 1) * head_dim] = (
            oh.reshape(m, head_dim).astype(cd))

    # Single output-projection GEMM with K = inner.
    y = dot(ho_ref[...], wo_ref[...]) + bo_ref[...]                # (M, dim) f32
    out_ref[...] = y.reshape(bt, n, dim)


def _vmem_capacity_bytes():
    try:
        return int(pltpu.get_tpu_info().vmem_capacity_bytes)
    except Exception:
        return 64 * 1024 * 1024    # conservative default (v7x per-TensorCore)


def _device_kind():
    try:
        return jax.devices()[0].device_kind.lower()
    except Exception:
        return ""


def _estimate_step_vmem(bt, n, dim, inner, in_itemsize, cd_size, exp_size):
    """Rough per-grid-step VMEM footprint: double-buffered I/O blocks, resident
    weights, and the live intermediates (with 1.5x headroom)."""
    m = bt * n
    io = 2 * (3 * m * dim * in_itemsize + m * dim * 4)
    weights = 2 * (8 * inner * dim * cd_size + dim * 4)
    inter = (m * 3 * inner * 4                 # qkv_words f32
             + m * 2 * inner * 4               # qk sum f32
             + m * 3 * inner * cd_size         # q3/k3/v3
             + bt * n * n * (4 + exp_size)     # sim + p (one head)
             + m * inner * cd_size             # head-output scratch
             + m * dim * 4)                    # y f32
    return io + weights + int(1.5 * inter)


def _pick_block_batch(B, n, fits):
    """Largest divisor of B whose per-step working set fits; prefer an even
    number of grid steps (v7x: 2 TCs on the 'parallel' axis) when each step
    still keeps a reasonably tall M."""
    divs = [d for d in range(1, B + 1) if B % d == 0]
    cands = [d for d in divs if fits(d)] or [1]
    bt = max(cands)
    if (B // bt) % 2 != 0:
        alt = [d for d in cands if (B // d) % 2 == 0 and d * n >= 256]
        if alt:
            bt = max(alt)
    return bt


def xt_attention(words, position, conscious, params, *,
                 num_heads, head_dim,
                 compute_dtype=jnp.bfloat16, block_batch=None):
    B, N, dim = words.shape
    inner = num_heads * head_dim
    scale = head_dim ** (-0.5)

    cd_is_bf16 = jnp.dtype(compute_dtype) == jnp.dtype(jnp.bfloat16)
    kind = _device_kind()
    bf16_eup = any(tag in kind for tag in ("v6", "v7", "7x"))
    exp_dtype = jnp.bfloat16 if (cd_is_bf16 and bf16_eup) else jnp.float32
    approx_recip = cd_is_bf16

    # Host-side weight fusion (one-off, outside the kernel).
    ww = jnp.concatenate([params["wq_w"] * scale, params["wk_w"],
                          params["wv_w"]], axis=1).astype(compute_dtype)
    wp = jnp.concatenate([params["wq_p"] * scale, params["wk_p"]],
                         axis=1).astype(compute_dtype)
    wc = jnp.concatenate([params["wq_c"] * scale, params["wk_c"]],
                         axis=1).astype(compute_dtype)
    wo = params["wo"].astype(compute_dtype)
    bo = params["bo"].astype(jnp.float32)

    # bf16 I/O on the fast path: halves the input DMA.  Output stays f32.
    if cd_is_bf16:
        words_in = words.astype(jnp.bfloat16)
        pos_in = position.astype(jnp.bfloat16)
        con_in = conscious.astype(jnp.bfloat16)
    else:
        words_in, pos_in, con_in = words, position, conscious

    in_itemsize = jnp.dtype(words_in.dtype).itemsize
    cd_size = jnp.dtype(compute_dtype).itemsize
    exp_size = jnp.dtype(exp_dtype).itemsize

    # Generation-aware tile sizing + VMEM limit.
    vmem_cap = _vmem_capacity_bytes()
    budget = int(vmem_cap * 0.75)                       # ~96 MiB v5e/v6e, ~48 MiB v7x
    target_rows = 1024 if vmem_cap >= (100 << 20) else 384

    def fits(d):
        if d * N > max(target_rows, N):
            return False
        return _estimate_step_vmem(d, N, dim, inner, in_itemsize,
                                   cd_size, exp_size) <= budget

    bt = _pick_block_batch(B, N, fits) if block_batch is None else block_batch
    assert B % bt == 0, "block_batch must divide the batch size"
    grid = (B // bt,)

    est = _estimate_step_vmem(bt, N, dim, inner, in_itemsize, cd_size, exp_size)
    vmem_limit = int(max(32 << 20, min(budget, est)))

    kernel = functools.partial(
        xt_attention_kernel,
        num_heads=num_heads, head_dim=head_dim, bt=bt, n=N,
        compute_dtype=compute_dtype, exp_dtype=exp_dtype,
        approx_recip=approx_recip)

    # NOTE: if xprof shows exposed DMA at small N, sweep
    # pipeline_mode=pl.Buffered(3) on the three seq input BlockSpecs.
    seq_spec = pl.BlockSpec((bt, N, dim), lambda b: (b, 0, 0))
    ww_spec = pl.BlockSpec((dim, 3 * inner), lambda b: (0, 0))
    wp_spec = pl.BlockSpec((dim, 2 * inner), lambda b: (0, 0))
    wc_spec = pl.BlockSpec((dim, 2 * inner), lambda b: (0, 0))
    wo_spec = pl.BlockSpec((inner, dim), lambda b: (0, 0))
    bo_spec = pl.BlockSpec((1, dim), lambda b: (0, 0))

    return pl.pallas_call(
        kernel,
        out_shape=jax.ShapeDtypeStruct((B, N, dim), jnp.float32),
        grid_spec=pltpu.PrefetchScalarGridSpec(
            num_scalar_prefetch=0,
            grid=grid,
            in_specs=[seq_spec, seq_spec, seq_spec,
                      ww_spec, wp_spec, wc_spec, wo_spec, bo_spec],
            out_specs=seq_spec,
            scratch_shapes=[pltpu.VMEM((bt * N, inner), compute_dtype)],
        ),
        compiler_params=pltpu.CompilerParams(
            dimension_semantics=("parallel",),
            vmem_limit_bytes=vmem_limit),
    )(words_in, pos_in, con_in, ww, wp, wc, wo, bo)


def reference(words, position, conscious, params, *, num_heads, head_dim):
    """Plain-JAX f32 reference mirroring the PyTorch forward."""
    B, N, dim = words.shape
    scale = head_dim ** (-0.5)

    def split(x):  # 'b n (h d) -> b h n d'
        return x.reshape(B, N, num_heads, head_dim).transpose(0, 2, 1, 3)

    q = (split(words @ params["wq_w"]) + split(position @ params["wq_p"])
         + split(conscious @ params["wq_c"]))
    k = (split(words @ params["wk_w"]) + split(position @ params["wk_p"])
         + split(conscious @ params["wk_c"]))
    v = split(words @ params["wv_w"])
    sim = jnp.einsum("bhid,bhjd->bhij", q, k) * scale
    attn = jax.nn.softmax(sim, axis=-1)
    out = jnp.einsum("bhij,bhjd->bhid", attn, v)
    out = out.transpose(0, 2, 1, 3).reshape(B, N, num_heads * head_dim)
    return out @ params["wo"] + params["bo"][0]


if __name__ == "__main__":
    # Small shapes consistent with the module: dim divisible by head_dim.
    B, N = 2, 8
    head_dim = 64
    num_heads = 2
    dim = head_dim * num_heads           # 128
    inner = head_dim * num_heads

    key = jax.random.PRNGKey(0)
    keys = jax.random.split(key, 12)

    def init_w(k, shape, fan_in):
        bound = 1.0 / (fan_in ** 0.5)
        return jax.random.uniform(k, shape, jnp.float32, -bound, bound)

    params = {
        "wq_w": init_w(keys[0], (dim, inner), dim),
        "wk_w": init_w(keys[1], (dim, inner), dim),
        "wv_w": init_w(keys[2], (dim, inner), dim),
        "wq_p": init_w(keys[3], (dim, inner), dim),
        "wk_p": init_w(keys[4], (dim, inner), dim),
        "wq_c": init_w(keys[5], (dim, inner), dim),
        "wk_c": init_w(keys[6], (dim, inner), dim),
        "wo":   init_w(keys[7], (inner, dim), inner),
        "bo":   init_w(keys[8], (1, dim), inner),
    }

    words     = jax.random.normal(keys[9],  (B, N, dim), jnp.float32)
    position  = jax.random.normal(keys[10], (B, N, dim), jnp.float32)
    conscious = jax.random.normal(keys[11], (B, N, dim), jnp.float32)

    # Fast path: bf16 operands + bf16 I/O, f32 accumulation, approx reciprocal.
    out_bf16 = xt_attention(words, position, conscious, params,
                            num_heads=num_heads, head_dim=head_dim)
    out_bf16 = jax.block_until_ready(out_bf16)

    # f32 path: f32 elementwise math, exact reciprocal (MXU default precision).
    out_f32 = xt_attention(words, position, conscious, params,
                           num_heads=num_heads, head_dim=head_dim,
                           compute_dtype=jnp.float32)
    out_f32 = jax.block_until_ready(out_f32)

    ref = reference(words, position, conscious, params,
                    num_heads=num_heads, head_dim=head_dim)

    assert out_bf16.shape == (B, N, dim)
    assert jnp.allclose(out_f32, ref, atol=2e-4, rtol=2e-4), "f32 mismatch vs reference"
    assert jnp.allclose(out_bf16, ref, atol=5e-2, rtol=5e-2), "bf16 mismatch vs reference"

    print("KERNEL_OK")
</pallas_src>

<mosaic_0001>
module attributes {stable_mosaic.version = 11 : i64} {
  func.func @xt_attention_kernel(%arg0: i32, %arg1: memref<2x8x128xbf16, #tpu.memory_space<vmem>>, %arg2: memref<2x8x128xbf16, #tpu.memory_space<vmem>>, %arg3: memref<2x8x128xbf16, #tpu.memory_space<vmem>>, %arg4: memref<128x384xbf16, #tpu.memory_space<vmem>>, %arg5: memref<128x256xbf16, #tpu.memory_space<vmem>>, %arg6: memref<128x256xbf16, #tpu.memory_space<vmem>>, %arg7: memref<128x128xbf16, #tpu.memory_space<vmem>>, %arg8: memref<1x128xf32, #tpu.memory_space<vmem>>, %arg9: memref<2x8x128xf32, #tpu.memory_space<vmem>>, %arg10: memref<16x128xbf16, #tpu.memory_space<vmem>>) attributes {dimension_semantics = [#tpu.dimension_semantics<parallel>], iteration_bounds = array<i64: 1>, scalar_prefetch = 0 : i64, scratch_operands = 1 : i64, tpu.core_type = #tpu.core_type<tc>, window_params = [{transform_indices = @transform_0, window_bounds = array<i64: 2, 8, 128>}, {transform_indices = @transform_1, window_bounds = array<i64: 2, 8, 128>}, {transform_indices = @transform_2, window_bounds = array<i64: 2, 8, 128>}, {pipeline_mode = #tpu.pipeline_mode<synchronous>, transform_indices = @transform_3, window_bounds = array<i64: 128, 384>}, {pipeline_mode = #tpu.pipeline_mode<synchronous>, transform_indices = @transform_4, window_bounds = array<i64: 128, 256>}, {pipeline_mode = #tpu.pipeline_mode<synchronous>, transform_indices = @transform_5, window_bounds = array<i64: 128, 256>}, {pipeline_mode = #tpu.pipeline_mode<synchronous>, transform_indices = @transform_6, window_bounds = array<i64: 128, 128>}, {pipeline_mode = #tpu.pipeline_mode<synchronous>, transform_indices = @transform_7, window_bounds = array<i64: 1, 128>}, {transform_indices = @transform_8, window_bounds = array<i64: 2, 8, 128>}]} {
    %c0 = arith.constant 0 : index
    %c0_0 = arith.constant 0 : index
    %c0_1 = arith.constant 0 : index
    %0 = vector.load %arg1[%c0, %c0_0, %c0_1] : memref<2x8x128xbf16, #tpu.memory_space<vmem>>, vector<2x8x128xbf16>
    %1 = vector.shape_cast %0 : vector<2x8x128xbf16> to vector<16x128xbf16>
    %c0_2 = arith.constant 0 : index
    %c0_3 = arith.constant 0 : index
    %c0_4 = arith.constant 0 : index
    %2 = vector.load %arg2[%c0_2, %c0_3, %c0_4] : memref<2x8x128xbf16, #tpu.memory_space<vmem>>, vector<2x8x128xbf16>
    %3 = vector.shape_cast %2 : vector<2x8x128xbf16> to vector<16x128xbf16>
    %c0_5 = arith.constant 0 : index
    %c0_6 = arith.constant 0 : index
    %c0_7 = arith.constant 0 : index
    %4 = vector.load %arg3[%c0_5, %c0_6, %c0_7] : memref<2x8x128xbf16, #tpu.memory_space<vmem>>, vector<2x8x128xbf16>
    %5 = vector.shape_cast %4 : vector<2x8x128xbf16> to vector<16x128xbf16>
    %c0_8 = arith.constant 0 : index
    %c0_9 = arith.constant 0 : index
    %6 = vector.load %arg4[%c0_8, %c0_9] : memref<128x384xbf16, #tpu.memory_space<vmem>>, vector<128x384xbf16>
    %cst = arith.constant dense<0.000000e+00> : vector<16x384xf32>
    %7 = tpu.matmul %1, %6, %cst {dimension_numbers = #tpu.dot_dimension_numbers<[1], [0], [0], [1], [0, 0, 1, 1], [], []>} : vector<16x128xbf16>, vector<128x384xbf16>, vector<16x384xf32> -> vector<16x384xf32>
    %8 = vector.extract_strided_slice %7 {offsets = [0, 0], sizes = [16, 256], strides = [1, 1]} : vector<16x384xf32> to vector<16x256xf32>
    %c0_10 = arith.constant 0 : index
    %c0_11 = arith.constant 0 : index
    %9 = vector.load %arg5[%c0_10, %c0_11] : memref<128x256xbf16, #tpu.memory_space<vmem>>, vector<128x256xbf16>
    %cst_12 = arith.constant dense<0.000000e+00> : vector<16x256xf32>
    %10 = tpu.matmul %3, %9, %cst_12 {dimension_numbers = #tpu.dot_dimension_numbers<[1], [0], [0], [1], [0, 0, 1, 1], [], []>} : vector<16x128xbf16>, vector<128x256xbf16>, vector<16x256xf32> -> vector<16x256xf32>
    %11 = arith.addf %8, %10 : vector<16x256xf32>
    %c0_13 = arith.constant 0 : index
    %c0_14 = arith.constant 0 : index
    %12 = vector.load %arg6[%c0_13, %c0_14] : memref<128x256xbf16, #tpu.memory_space<vmem>>, vector<128x256xbf16>
    %cst_15 = arith.constant dense<0.000000e+00> : vector<16x256xf32>
    %13 = tpu.matmul %5, %12, %cst_15 {dimension_numbers = #tpu.dot_dimension_numbers<[1], [0], [0], [1], [0, 0, 1, 1], [], []>} : vector<16x128xbf16>, vector<128x256xbf16>, vector<16x256xf32> -> vector<16x256xf32>
    %14 = arith.addf %11, %13 : vector<16x256xf32>
    %15 = vector.extract_strided_slice %14 {offsets = [0, 0], sizes = [16, 128], strides = [1, 1]} : vector<16x256xf32> to vector<16x128xf32>
    %16 = vector.shape_cast %15 : vector<16x128xf32> to vector<2x8x128xf32>
    %17 = arith.truncf %16 : vector<2x8x128xf32> to vector<2x8x128xbf16>
    %18 = vector.extract_strided_slice %14 {offsets = [0, 128], sizes = [16, 128], strides = [1, 1]} : vector<16x256xf32> to vector<16x128xf32>
    %19 = vector.shape_cast %18 : vector<16x128xf32> to vector<2x8x128xf32>
    %20 = arith.truncf %19 : vector<2x8x128xf32> to vector<2x8x128xbf16>
    %21 = vector.extract_strided_slice %7 {offsets = [0, 256], sizes = [16, 128], strides = [1, 1]} : vector<16x384xf32> to vector<16x128xf32>
    %22 = vector.shape_cast %21 : vector<16x128xf32> to vector<2x8x128xf32>
    %23 = arith.truncf %22 : vector<2x8x128xf32> to vector<2x8x128xbf16>
    %24 = vector.extract_strided_slice %17 {offsets = [0, 0, 0], sizes = [2, 8, 64], strides = [1, 1, 1]} : vector<2x8x128xbf16> to vector<2x8x64xbf16>
    %25 = vector.extract_strided_slice %20 {offsets = [0, 0, 0], sizes = [2, 8, 64], strides = [1, 1, 1]} : vector<2x8x128xbf16> to vector<2x8x64xbf16>
    %26 = vector.extract_strided_slice %23 {offsets = [0, 0, 0], sizes = [2, 8, 64], strides = [1, 1, 1]} : vector<2x8x128xbf16> to vector<2x8x64xbf16>
    "tpu.trace_start"() <{level = 10 : i32, message = "bnd,bmd->bnm"}> : () -> ()
    %cst_16 = arith.constant dense<0.000000e+00> : vector<2x8x8xf32>
    %27 = tpu.matmul %24, %25, %cst_16 {dimension_numbers = #tpu.dot_dimension_numbers<[2], [2], [1], [1], [0, 0, 0, 1, 1, 1], [0], [0]>} : vector<2x8x64xbf16>, vector<2x8x64xbf16>, vector<2x8x8xf32> -> vector<2x8x8xf32>
    "tpu.trace_stop"() : () -> ()
    %cst_17 = arith.constant dense<0xFF800000> : vector<2x8xf32>
    %28 = vector.multi_reduction <maximumf>, %27, %cst_17 [2] : vector<2x8x8xf32> to vector<2x8xf32>
    %29 = vector.shape_cast %28 : vector<2x8xf32> to vector<2x8x1xf32>
    %30 = vector.broadcast %29 : vector<2x8x1xf32> to vector<2x8x8xf32>
    %31 = arith.subf %27, %30 : vector<2x8x8xf32>
    %32 = math.exp %31 : vector<2x8x8xf32>
    %cst_18 = arith.constant dense<0.000000e+00> : vector<2x8xf32>
    %33 = vector.multi_reduction <add>, %32, %cst_18 [2] : vector<2x8x8xf32> to vector<2x8xf32>
    %34 = vector.shape_cast %33 : vector<2x8xf32> to vector<2x8x1xf32>
    %35 = arith.truncf %32 : vector<2x8x8xf32> to vector<2x8x8xbf16>
    "tpu.trace_start"() <{level = 10 : i32, message = "bnm,bmd->bnd"}> : () -> ()
    %cst_19 = arith.constant dense<0.000000e+00> : vector<2x8x64xf32>
    %36 = tpu.matmul %35, %26, %cst_19 {dimension_numbers = #tpu.dot_dimension_numbers<[2], [1], [1], [2], [0, 0, 0, 1, 1, 2], [0], [0]>} : vector<2x8x8xbf16>, vector<2x8x64xbf16>, vector<2x8x64xf32> -> vector<2x8x64xf32>
    "tpu.trace_stop"() : () -> ()
    %37 = tpu.reciprocal %34 {approx = true} : vector<2x8x1xf32> -> vector<2x8x1xf32>
    %38 = vector.broadcast %37 : vector<2x8x1xf32> to vector<2x8x64xf32>
    %39 = arith.mulf %36, %38 : vector<2x8x64xf32>
    %40 = vector.shape_cast %39 : vector<2x8x64xf32> to vector<16x64xf32>
    %41 = arith.truncf %40 : vector<16x64xf32> to vector<16x64xbf16>
    %c0_20 = arith.constant 0 : index
    %c0_21 = arith.constant 0 : index
    %42 = vector.load %arg10[%c0_20, %c0_21] : memref<16x128xbf16, #tpu.memory_space<vmem>>, vector<16x64xbf16>
    tpu.vector_store %arg10[%c0_20, %c0_21], %41 {strides = array<i32>} : memref<16x128xbf16, #tpu.memory_space<vmem>>, vector<16x64xbf16>,
    %43 = vector.extract_strided_slice %17 {offsets = [0, 0, 64], sizes = [2, 8, 64], strides = [1, 1, 1]} : vector<2x8x128xbf16> to vector<2x8x64xbf16>
    %44 = vector.extract_strided_slice %20 {offsets = [0, 0, 64], sizes = [2, 8, 64], strides = [1, 1, 1]} : vector<2x8x128xbf16> to vector<2x8x64xbf16>
    %45 = vector.extract_strided_slice %23 {offsets = [0, 0, 64], sizes = [2, 8, 64], strides = [1, 1, 1]} : vector<2x8x128xbf16> to vector<2x8x64xbf16>
    "tpu.trace_start"() <{level = 10 : i32, message = "bnd,bmd->bnm"}> : () -> ()
    %cst_22 = arith.constant dense<0.000000e+00> : vector<2x8x8xf32>
    %46 = tpu.matmul %43, %44, %cst_22 {dimension_numbers = #tpu.dot_dimension_numbers<[2], [2], [1], [1], [0, 0, 0, 1, 1, 1], [0], [0]>} : vector<2x8x64xbf16>, vector<2x8x64xbf16>, vector<2x8x8xf32> -> vector<2x8x8xf32>
    "tpu.trace_stop"() : () -> ()
    %cst_23 = arith.constant dense<0xFF800000> : vector<2x8xf32>
    %47 = vector.multi_reduction <maximumf>, %46, %cst_23 [2] : vector<2x8x8xf32> to vector<2x8xf32>
    %48 = vector.shape_cast %47 : vector<2x8xf32> to vector<2x8x1xf32>
    %49 = vector.broadcast %48 : vector<2x8x1xf32> to vector<2x8x8xf32>
    %50 = arith.subf %46, %49 : vector<2x8x8xf32>
    %51 = math.exp %50 : vector<2x8x8xf32>
    %cst_24 = arith.constant dense<0.000000e+00> : vector<2x8xf32>
    %52 = vector.multi_reduction <add>, %51, %cst_24 [2] : vector<2x8x8xf32> to vector<2x8xf32>
    %53 = vector.shape_cast %52 : vector<2x8xf32> to vector<2x8x1xf32>
    %54 = arith.truncf %51 : vector<2x8x8xf32> to vector<2x8x8xbf16>
    "tpu.trace_start"() <{level = 10 : i32, message = "bnm,bmd->bnd"}> : () -> ()
    %cst_25 = arith.constant dense<0.000000e+00> : vector<2x8x64xf32>
    %55 = tpu.matmul %54, %45, %cst_25 {dimension_numbers = #tpu.dot_dimension_numbers<[2], [1], [1], [2], [0, 0, 0, 1, 1, 2], [0], [0]>} : vector<2x8x8xbf16>, vector<2x8x64xbf16>, vector<2x8x64xf32> -> vector<2x8x64xf32>
    "tpu.trace_stop"() : () -> ()
    %56 = tpu.reciprocal %53 {approx = true} : vector<2x8x1xf32> -> vector<2x8x1xf32>
    %57 = vector.broadcast %56 : vector<2x8x1xf32> to vector<2x8x64xf32>
    %58 = arith.mulf %55, %57 : vector<2x8x64xf32>
    %59 = vector.shape_cast %58 : vector<2x8x64xf32> to vector<16x64xf32>
    %60 = arith.truncf %59 : vector<16x64xf32> to vector<16x64xbf16>
    %c0_26 = arith.constant 0 : index
    %c64 = arith.constant 64 : index
    %61 = vector.load %arg10[%c0_26, %c64] : memref<16x128xbf16, #tpu.memory_space<vmem>>, vector<16x64xbf16>
    tpu.vector_store %arg10[%c0_26, %c64], %60 {strides = array<i32>} : memref<16x128xbf16, #tpu.memory_space<vmem>>, vector<16x64xbf16>,
    %c0_27 = arith.constant 0 : index
    %c0_28 = arith.constant 0 : index
    %62 = vector.load %arg10[%c0_27, %c0_28] : memref<16x128xbf16, #tpu.memory_space<vmem>>, vector<16x128xbf16>
    %c0_29 = arith.constant 0 : index
    %c0_30 = arith.constant 0 : index
    %63 = vector.load %arg7[%c0_29, %c0_30] : memref<128x128xbf16, #tpu.memory_space<vmem>>, vector<128x128xbf16>
    %cst_31 = arith.constant dense<0.000000e+00> : vector<16x128xf32>
    %64 = tpu.matmul %62, %63, %cst_31 {dimension_numbers = #tpu.dot_dimension_numbers<[1], [0], [0], [1], [0, 0, 1, 1], [], []>} : vector<16x128xbf16>, vector<128x128xbf16>, vector<16x128xf32> -> vector<16x128xf32>
    %c0_32 = arith.constant 0 : index
    %c0_33 = arith.constant 0 : index
    %65 = vector.load %arg8[%c0_32, %c0_33] : memref<1x128xf32, #tpu.memory_space<vmem>>, vector<1x128xf32>
    %66 = vector.broadcast %65 : vector<1x128xf32> to vector<16x128xf32>
    %67 = arith.addf %64, %66 : vector<16x128xf32>
    %68 = vector.shape_cast %67 : vector<16x128xf32> to vector<2x8x128xf32>
    %c0_34 = arith.constant 0 : index
    %c0_35 = arith.constant 0 : index
    %c0_36 = arith.constant 0 : index
    %69 = vector.load %arg9[%c0_34, %c0_35, %c0_36] : memref<2x8x128xf32, #tpu.memory_space<vmem>>, vector<2x8x128xf32>
    tpu.vector_store %arg9[%c0_34, %c0_35, %c0_36], %68 {strides = array<i32>} : memref<2x8x128xf32, #tpu.memory_space<vmem>>, vector<2x8x128xf32>,
    return
  }
  func.func @transform_0(%arg0: i32) -> (i32, i32, i32) {
    %c0_i32 = arith.constant 0 : i32
    %c0_i32_0 = arith.constant 0 : i32
    %c0_i32_1 = arith.constant 0 : i32
    return %arg0, %c0_i32, %c0_i32_0 : i32, i32, i32
  }
  func.func @transform_1(%arg0: i32) -> (i32, i32, i32) {
    %c0_i32 = arith.constant 0 : i32
    %c0_i32_0 = arith.constant 0 : i32
    %c0_i32_1 = arith.constant 0 : i32
    return %arg0, %c0_i32, %c0_i32_0 : i32, i32, i32
  }
  func.func @transform_2(%arg0: i32) -> (i32, i32, i32) {
    %c0_i32 = arith.constant 0 : i32
    %c0_i32_0 = arith.constant 0 : i32
    %c0_i32_1 = arith.constant 0 : i32
    return %arg0, %c0_i32, %c0_i32_0 : i32, i32, i32
  }
  func.func @transform_3(%arg0: i32) -> (i32, i32) {
    %c0_i32 = arith.constant 0 : i32
    %c0_i32_0 = arith.constant 0 : i32
    %c0_i32_1 = arith.constant 0 : i32
    return %c0_i32, %c0_i32_0 : i32, i32
  }
  func.func @transform_4(%arg0: i32) -> (i32, i32) {
    %c0_i32 = arith.constant 0 : i32
    %c0_i32_0 = arith.constant 0 : i32
    %c0_i32_1 = arith.constant 0 : i32
    return %c0_i32, %c0_i32_0 : i32, i32
  }
  func.func @transform_5(%arg0: i32) -> (i32, i32) {
    %c0_i32 = arith.constant 0 : i32
    %c0_i32_0 = arith.constant 0 : i32
    %c0_i32_1 = arith.constant 0 : i32
    return %c0_i32, %c0_i32_0 : i32, i32
  }
  func.func @transform_6(%arg0: i32) -> (i32, i32) {
    %c0_i32 = arith.constant 0 : i32
    %c0_i32_0 = arith.constant 0 : i32
    %c0_i32_1 = arith.constant 0 : i32
    return %c0_i32, %c0_i32_0 : i32, i32
  }
  func.func @transform_7(%arg0: i32) -> (i32, i32) {
    %c0_i32 = arith.constant 0 : i32
    %c0_i32_0 = arith.constant 0 : i32
    %c0_i32_1 = arith.constant 0 : i32
    return %c0_i32, %c0_i32_0 : i32, i32
  }
  func.func @transform_8(%arg0: i32) -> (i32, i32, i32) {
    %c0_i32 = arith.constant 0 : i32
    %c0_i32_0 = arith.constant 0 : i32
    %c0_i32_1 = arith.constant 0 : i32
    return %arg0, %c0_i32, %c0_i32_0 : i32, i32, i32
  }
}

</mosaic_0001>

<llo_original>
// kernel: tpu_custom_call.1
$region0: #{tpu_custom_call.1}
  #allocation0 [shape = 'u32[]', space=smem, size = 0x4, offset = 0x4, fixed_abs, tag = 'smem constant byte address 0x4 - core index']
  #allocation1 [shape = 'u32[144,128]{1,0:T(1,128)}', space=vmem, size = 0x12000, scoped, tag = 'internal scratch']
  #allocation2 [shape = 'bf16[16,128]{1,0:T(16,128)(2,1)}', space=vmem, size = 0x1000, scoped, tag = 'scratch operand']
  %s0 = inlined_call_operand.hbm [shape: bf16[2,8,128], index: 0, kind: input, shape index: {}]
  %s1 = inlined_call_operand.hbm [shape: bf16[2,8,128], index: 1, kind: input, shape index: {}]
  %s2 = inlined_call_operand.hbm [shape: bf16[2,8,128], index: 2, kind: input, shape index: {}]
  %s3 = inlined_call_operand.hbm [shape: bf16[128,384], index: 3, kind: input, shape index: {}]
  %s4 = inlined_call_operand.hbm [shape: bf16[128,256], index: 4, kind: input, shape index: {}]
  %s5 = inlined_call_operand.hbm [shape: bf16[128,256], index: 5, kind: input, shape index: {}]
  %s6 = inlined_call_operand.hbm [shape: bf16[128,128], index: 6, kind: input, shape index: {}]
  %s7 = inlined_call_operand.vmem [shape: f32[1,128], index: 7, kind: input, shape index: {}]
  %s8 = inlined_call_operand.hbm [shape: f32[2,8,128], index: 8, kind: output, shape index: {}]
  %s9 = sld [smem:[#allocation0]]
  $region70: #{tpu_custom_call.1} parent=0
    _
  %s11 = ssub.s32 1, %s9
  %s12 = scalar_select 0, %s11, %s9
  $region1: #{tpu_custom_call.1} parent=0
    #allocation3 [shape = 'u8[4096]{0}', space=vmem, size = 0x1000, scoped, tag = 'input window, operand 0, single buffered']
    #allocation4 [shape = 's32[1]{0}', space=sflag, size = 0x4, scoped, tag = 'scoped memory for tpu_custom_call.1']
    #allocation5 [shape = 's32[1]{0}', space=sflag, size = 0x4, scoped, tag = 'scoped memory for tpu_custom_call.1']
    #allocation6 [shape = 'u8[4096]{0}', space=vmem, size = 0x1000, scoped, tag = 'input window, operand 1, single buffered']
    #allocation7 [shape = 's32[1]{0}', space=sflag, size = 0x4, scoped, tag = 'scoped memory for tpu_custom_call.1']
    #allocation8 [shape = 'u8[4096]{0}', space=vmem, size = 0x1000, scoped, tag = 'input window, operand 2, single buffered']
    #allocation9 [shape = 'u8[98304]{0}', space=vmem, size = 0x18000, scoped, tag = 'input window, operand 3, single buffered']
    #allocation10 [shape = 's32[1]{0}', space=sflag, size = 0x4, scoped, tag = 'scoped memory for tpu_custom_call.1']
    #allocation11 [shape = 'u8[65536]{0}', space=vmem, size = 0x10000, scoped, tag = 'input window, operand 4, single buffered']
    #allocation12 [shape = 'u8[65536]{0}', space=vmem, size = 0x10000, scoped, tag = 'input window, operand 5, single buffered']
    #allocation13 [shape = 's32[1]{0}', space=sflag, size = 0x4, scoped, tag = 'scoped memory for tpu_custom_call.1']
    #allocation14 [shape = 'u8[32768]{0}', space=vmem, size = 0x8000, scoped, tag = 'input window, operand 6, single buffered']
    #allocation15 [shape = 'u8[8192]{0}', space=vmem, size = 0x2000, scoped, tag = 'output window, operand 0, single buffered']
    %13 = vsyncpa [#allocation4], 0
    %14 = vsyncpa [#allocation7], 0
    %15 = vsyncpa [#allocation10], 0
    %16 = vsyncpa [#allocation13], 0
    %17 = vsyncpa [#allocation5], 0
    // Predicated region
    $region2: #{tpu_custom_call.1} parent=1 // pred_check
      _
    $region3: #{tpu_custom_call.1} parent=1 // pred_check_branch
      %19 = sbr.rel (0) target = $region5
    $region4: #{tpu_custom_call.1} parent=1 // pred_region
      %s21 = ssub.s32 128, 128
      %22 = vsyncadd [#allocation4], %s21
      %s23 = sshll.u32 [#allocation3], 4
      %s24 = int_to_ptr.vmem [resolvable:$true] %s23
      %29 = dma.hbm_to_vmem [thread:$0]  %s0, 128, %s24, [#allocation4], 64, 64, 4
    $region5: #{tpu_custom_call.1} parent=1 // pred_fallthru
      _
    // Predicated region
    $region6: #{tpu_custom_call.1} parent=1 // pred_check
      _
    $region7: #{tpu_custom_call.1} parent=1 // pred_check_branch
      %31 = sbr.rel (0) target = $region9
    $region8: #{tpu_custom_call.1} parent=1 // pred_region
      %s33 = ssub.s32 128, 128
      %34 = vsyncadd [#allocation7], %s33
      %s35 = sshll.u32 [#allocation6], 4
      %s36 = int_to_ptr.vmem [resolvable:$true] %s35
      %41 = dma.hbm_to_vmem [thread:$0]  %s1, 128, %s36, [#allocation7], 64, 64, 4
    $region9: #{tpu_custom_call.1} parent=1 // pred_fallthru
      _
    // Predicated region
    $region10: #{tpu_custom_call.1} parent=1 // pred_check
      _
    $region11: #{tpu_custom_call.1} parent=1 // pred_check_branch
      %43 = sbr.rel (0) target = $region13
    $region12: #{tpu_custom_call.1} parent=1 // pred_region
      %s45 = ssub.s32 128, 128
      %46 = vsyncadd [#allocation7], %s45
      %s47 = sshll.u32 [#allocation8], 4
      %s48 = int_to_ptr.vmem [resolvable:$true] %s47
      %53 = dma.hbm_to_vmem [thread:$0]  %s2, 128, %s48, [#allocation7], 64, 64, 4
    $region13: #{tpu_custom_call.1} parent=1 // pred_fallthru
      _
    // Predicated region
    $region14: #{tpu_custom_call.1} parent=1 // pred_check
      _
    $region15: #{tpu_custom_call.1} parent=1 // pred_check_branch
      %55 = sbr.rel (0) target = $region17
    $region16: #{tpu_custom_call.1} parent=1 // pred_region
      %s57 = ssub.s32 3072, 3072
      %58 = vsyncadd [#allocation10], %s57
      %s59 = sshll.u32 [#allocation9], 4
      %s60 = int_to_ptr.vmem [resolvable:$true] %s59
      %65 = dma.hbm_to_vmem [thread:$0]  %s3, 3072, %s60, [#allocation10], 192, 192, 12
    $region17: #{tpu_custom_call.1} parent=1 // pred_fallthru
      _
    // Predicated region
    $region18: #{tpu_custom_call.1} parent=1 // pred_check
      _
    $region19: #{tpu_custom_call.1} parent=1 // pred_check_branch
      %67 = sbr.rel (0) target = $region21
    $region20: #{tpu_custom_call.1} parent=1 // pred_region
      %s69 = ssub.s32 2048, 2048
      %70 = vsyncadd [#allocation10], %s69
      %s71 = sshll.u32 [#allocation11], 4
      %s72 = int_to_ptr.vmem [resolvable:$true] %s71
      %77 = dma.hbm_to_vmem [thread:$0]  %s4, 2048, %s72, [#allocation10], 128, 128, 8
    $region21: #{tpu_custom_call.1} parent=1 // pred_fallthru
      _
    // Predicated region
    $region22: #{tpu_custom_call.1} parent=1 // pred_check
      _
    $region23: #{tpu_custom_call.1} parent=1 // pred_check_branch
      %79 = sbr.rel (0) target = $region25
    $region24: #{tpu_custom_call.1} parent=1 // pred_region
      %s81 = ssub.s32 2048, 2048
      %82 = vsyncadd [#allocation13], %s81
      %s83 = sshll.u32 [#allocation12], 4
      %s84 = int_to_ptr.vmem [resolvable:$true] %s83
      %89 = dma.hbm_to_vmem [thread:$0]  %s5, 2048, %s84, [#allocation13], 128, 128, 8
    $region25: #{tpu_custom_call.1} parent=1 // pred_fallthru
      _
    // Predicated region
    $region26: #{tpu_custom_call.1} parent=1 // pred_check
      _
    $region27: #{tpu_custom_call.1} parent=1 // pred_check_branch
      %91 = sbr.rel (0) target = $region29
    $region28: #{tpu_custom_call.1} parent=1 // pred_region
      %s93 = ssub.s32 1024, 1024
      %94 = vsyncadd [#allocation13], %s93
      %s95 = sshll.u32 [#allocation14], 4
      %s96 = int_to_ptr.vmem [resolvable:$true] %s95
      %101 = dma.hbm_to_vmem [thread:$0]  %s6, 1024, %s96, [#allocation13], 64, 64, 4
    $region29: #{tpu_custom_call.1} parent=1 // pred_fallthru
      _
    // Predicated region
    $region30: #{tpu_custom_call.1} parent=1 // pred_check
      _
    $region31: #{tpu_custom_call.1} parent=1 // pred_check_branch
      %103 = sbr.rel (0) target = $region33
    $region32: #{tpu_custom_call.1} parent=1 // pred_region
      _
    $region33: #{tpu_custom_call.1} parent=1 // pred_fallthru
      _
    // Predicated region
    $region34: #{tpu_custom_call.1} parent=1 // pred_check
      _
    $region35: #{tpu_custom_call.1} parent=1 // pred_check_branch
      %105 = sbr.rel (0) target = $region37
    $region36: #{tpu_custom_call.1} parent=1 // pred_region
      %106 = dma.done [#allocation4], 128
    $region37: #{tpu_custom_call.1} parent=1 // pred_fallthru
      _
    // Predicated region
    $region38: #{tpu_custom_call.1} parent=1 // pred_check
      _
    $region39: #{tpu_custom_call.1} parent=1 // pred_check_branch
      %108 = sbr.rel (0) target = $region41
    $region40: #{tpu_custom_call.1} parent=1 // pred_region
      %109 = dma.done [#allocation7], 128
    $region41: #{tpu_custom_call.1} parent=1 // pred_fallthru
      _
    // Predicated region
    $region42: #{tpu_custom_call.1} parent=1 // pred_check
      _
    $region43: #{tpu_custom_call.1} parent=1 // pred_check_branch
      %111 = sbr.rel (0) target = $region45
    $region44: #{tpu_custom_call.1} parent=1 // pred_region
      %112 = dma.done [#allocation7], 128
    $region45: #{tpu_custom_call.1} parent=1 // pred_fallthru
      _
    // Predicated region
    $region46: #{tpu_custom_call.1} parent=1 // pred_check
      _
    $region47: #{tpu_custom_call.1} parent=1 // pred_check_branch
      %114 = sbr.rel (0) target = $region49
    $region48: #{tpu_custom_call.1} parent=1 // pred_region
      %115 = dma.done [#allocation10], 3072
    $region49: #{tpu_custom_call.1} parent=1 // pred_fallthru
      _
    // Predicated region
    $region50: #{tpu_custom_call.1} parent=1 // pred_check
      _
    $region51: #{tpu_custom_call.1} parent=1 // pred_check_branch
      %117 = sbr.rel (0) target = $region53
    $region52: #{tpu_custom_call.1} parent=1 // pred_region
      %118 = dma.done [#allocation10], 2048
    $region53: #{tpu_custom_call.1} parent=1 // pred_fallthru
      _
    // Predicated region
    $region54: #{tpu_custom_call.1} parent=1 // pred_check
      _
    $region55: #{tpu_custom_call.1} parent=1 // pred_check_branch
      %120 = sbr.rel (0) target = $region57
    $region56: #{tpu_custom_call.1} parent=1 // pred_region
      %121 = dma.done [#allocation13], 2048
    $region57: #{tpu_custom_call.1} parent=1 // pred_fallthru
      _
    // Predicated region
    $region58: #{tpu_custom_call.1} parent=1 // pred_check
      _
    $region59: #{tpu_custom_call.1} parent=1 // pred_check_branch
      %123 = sbr.rel (0) target = $region61
    $region60: #{tpu_custom_call.1} parent=1 // pred_region
      %124 = dma.done [#allocation13], 1024
    $region61: #{tpu_custom_call.1} parent=1 // pred_fallthru
      _
    %v126 = vld [vmem:[#allocation3] sm:$0xf]
    %v127 = vld [vmem:[#allocation3 + $0x4] sm:$0xf]
    %v128 = vld [vmem:[#allocation6] sm:$0xf]
    %v129 = vld [vmem:[#allocation6 + $0x4] sm:$0xf]
    %v130 = vld [vmem:[#allocation8] sm:$0xf]
    %v131 = vld [vmem:[#allocation8 + $0x4] sm:$0xf]
    %v132 = vld [vmem:[#allocation9] sm:$0xff]
    %v133 = vld [vmem:[#allocation9 + $0x8] sm:$0xf]
    %v134 = vld [vmem:[#allocation9 + $0xc] sm:$0xff]
    %v135 = vld [vmem:[#allocation9 + $0x14] sm:$0xf]
    %v136 = vld [vmem:[#allocation9 + $0x18] sm:$0xff]
    %v137 = vld [vmem:[#allocation9 + $0x20] sm:$0xf]
    %v138 = vld [vmem:[#allocation9 + $0x24] sm:$0xff]
    %v139 = vld [vmem:[#allocation9 + $0x2c] sm:$0xf]
    %v140 = vld [vmem:[#allocation9 + $0x30] sm:$0xff]
    %v141 = vld [vmem:[#allocation9 + $0x38] sm:$0xf]
    %v142 = vld [vmem:[#allocation9 + $0x3c] sm:$0xff]
    %v143 = vld [vmem:[#allocation9 + $0x44] sm:$0xf]
    %v144 = vld [vmem:[#allocation9 + $0x48] sm:$0xff]
    %v145 = vld [vmem:[#allocation9 + $0x50] sm:$0xf]
    %v146 = vld [vmem:[#allocation9 + $0x54] sm:$0xff]
    %v147 = vld [vmem:[#allocation9 + $0x5c] sm:$0xf]
    %v148 = vld [vmem:[#allocation9 + $0x60] sm:$0xff]
    %v149 = vld [vmem:[#allocation9 + $0x68] sm:$0xf]
    %v150 = vld [vmem:[#allocation9 + $0x6c] sm:$0xff]
    %v151 = vld [vmem:[#allocation9 + $0x74] sm:$0xf]
    %v152 = vld [vmem:[#allocation9 + $0x78] sm:$0xff]
    %v153 = vld [vmem:[#allocation9 + $0x80] sm:$0xf]
    %v154 = vld [vmem:[#allocation9 + $0x84] sm:$0xff]
    %v155 = vld [vmem:[#allocation9 + $0x8c] sm:$0xf]
    %v156 = vld [vmem:[#allocation9 + $0x90] sm:$0xff]
    %v157 = vld [vmem:[#allocation9 + $0x98] sm:$0xf]
    %v158 = vld [vmem:[#allocation9 + $0x9c] sm:$0xff]
    %v159 = vld [vmem:[#allocation9 + $0xa4] sm:$0xf]
    %v160 = vld [vmem:[#allocation9 + $0xa8] sm:$0xff]
    %v161 = vld [vmem:[#allocation9 + $0xb0] sm:$0xf]
    %v162 = vld [vmem:[#allocation9 + $0xb4] sm:$0xff]
    %v163 = vld [vmem:[#allocation9 + $0xbc] sm:$0xf]
    %v166 = vunpack.c.l.b16 %v126
    %v167 = vunpack.c.l.b16 %v127
    %v168 = vpack.c.b16 %v167, %v166
    %v202 = vunpack.c.l.b16 %v132
    %v203 = vunpack.c.h.b16 %v132
    %v204 = vunpack.c.l.b16 %v133
    %v205 = vunpack.c.l.b16 %v134
    %v206 = vunpack.c.h.b16 %v134
    %v207 = vunpack.c.l.b16 %v135
    %v208 = vunpack.c.l.b16 %v136
    %v209 = vunpack.c.h.b16 %v136
    %v210 = vunpack.c.l.b16 %v137
    %v211 = vunpack.c.l.b16 %v138
    %v212 = vunpack.c.h.b16 %v138
    %v213 = vunpack.c.l.b16 %v139
    %v214 = vunpack.c.l.b16 %v140
    %v215 = vunpack.c.h.b16 %v140
    %v216 = vunpack.c.l.b16 %v141
    %v217 = vunpack.c.l.b16 %v142
    %v218 = vunpack.c.h.b16 %v142
    %v219 = vunpack.c.l.b16 %v143
    %v220 = vunpack.c.l.b16 %v144
    %v221 = vunpack.c.h.b16 %v144
    %v222 = vunpack.c.l.b16 %v145
    %v223 = vunpack.c.l.b16 %v146
    %v224 = vunpack.c.h.b16 %v146
    %v225 = vunpack.c.l.b16 %v147
    %v226 = vunpack.c.l.b16 %v148
    %v227 = vunpack.c.h.b16 %v148
    %v228 = vunpack.c.l.b16 %v149
    %v229 = vunpack.c.l.b16 %v150
    %v230 = vunpack.c.h.b16 %v150
    %v231 = vunpack.c.l.b16 %v151
    %v232 = vunpack.c.l.b16 %v152
    %v233 = vunpack.c.h.b16 %v152
    %v234 = vunpack.c.l.b16 %v153
    %v235 = vunpack.c.l.b16 %v154
    %v236 = vunpack.c.h.b16 %v154
    %v237 = vunpack.c.l.b16 %v155
    %v238 = vunpack.c.l.b16 %v156
    %v239 = vunpack.c.h.b16 %v156
    %v240 = vunpack.c.l.b16 %v157
    %v241 = vunpack.c.l.b16 %v158
    %v242 = vunpack.c.h.b16 %v158
    %v243 = vunpack.c.l.b16 %v159
    %v244 = vunpack.c.l.b16 %v160
    %v245 = vunpack.c.h.b16 %v160
    %v246 = vunpack.c.l.b16 %v161
    %v247 = vunpack.c.l.b16 %v162
    %v248 = vunpack.c.h.b16 %v162
    %v249 = vunpack.c.l.b16 %v163
    %v250 = vpack.c.b16 %v205, %v202
    %v251 = vpack.c.b16 %v206, %v203
    %v252 = vpack.c.b16 %v207, %v204
    %v253 = vpack.c.b16 %v211, %v208
    %v254 = vpack.c.b16 %v212, %v209
    %v255 = vpack.c.b16 %v213, %v210
    %v256 = vpack.c.b16 %v217, %v214
    %v257 = vpack.c.b16 %v218, %v215
    %v258 = vpack.c.b16 %v219, %v216
    %v259 = vpack.c.b16 %v223, %v220
    %v260 = vpack.c.b16 %v224, %v221
    %v261 = vpack.c.b16 %v225, %v222
    %v262 = vpack.c.b16 %v229, %v226
    %v263 = vpack.c.b16 %v230, %v227
    %v264 = vpack.c.b16 %v231, %v228
    %v265 = vpack.c.b16 %v235, %v232
    %v266 = vpack.c.b16 %v236, %v233
    %v267 = vpack.c.b16 %v237, %v234
    %v268 = vpack.c.b16 %v241, %v238
    %v269 = vpack.c.b16 %v242, %v239
    %v270 = vpack.c.b16 %v243, %v240
    %v271 = vpack.c.b16 %v247, %v244
    %v272 = vpack.c.b16 %v248, %v245
    %v273 = vpack.c.b16 %v249, %v246
    %298 = vmatprep.subr.bf16.mxu0 %v251
    %299 = vmatpush1.bf16.msra.mxu0 %v250
    %300 = vmatprep.subr.bf16.mxu0 %v254
    %301 = vmatpush1.bf16.msra.mxu0 %v253
    %302 = vmatprep.subr.bf16.mxu0 %v257
    %303 = vmatpush1.bf16.msra.mxu0 %v256
    %304 = vmatprep.subr.bf16.mxu0 %v260
    %305 = vmatpush1.bf16.msra.mxu0 %v259
    %306 = vmatprep.subr.bf16.mxu0 %v263
    %307 = vmatpush1.bf16.msra.mxu0 %v262
    %308 = vmatprep.subr.bf16.mxu0 %v266
    %309 = vmatpush1.bf16.msra.mxu0 %v265
    %310 = vmatprep.subr.bf16.mxu0 %v269
    %311 = vmatpush1.bf16.msra.mxu0 %v268
    %312 = vmatprep.subr.bf16.mxu0 %v272
    %313 = vmatpush1.bf16.msra.mxu0 %v271
    %314 = vmatprep.subr.bf16.mxu0 0
    %315 = vmatpush1.bf16.msra.mxu0 0
    %316 = vmatprep.subr.bf16.mxu0 0
    %317 = vmatpush1.bf16.msra.mxu0 0
    %318 = vmatprep.subr.bf16.mxu0 0
    %319 = vmatpush1.bf16.msra.mxu0 0
    %320 = vmatprep.subr.bf16.mxu0 0
    %321 = vmatpush1.bf16.msra.mxu0 0
    %322 = vmatprep.subr.bf16.mxu0 0
    %323 = vmatpush1.bf16.msra.mxu0 0
    %324 = vmatprep.subr.bf16.mxu0 0
    %325 = vmatpush1.bf16.msra.mxu0 0
    %326 = vmatprep.subr.bf16.mxu0 0
    %327 = vmatpush1.bf16.msra.mxu0 0
    %328 = vmatprep.subr.bf16.mxu0 0
    %329 = vmatpush1.bf16.msra.mxu0 0
    %330 = vmatprep.mubr.bf16.mxu0 0
    %331 = vmatmul.mubr.bf16.gmra.mrb[0].mxu0 %v168
    %v332 = vpop.f32.mrb[0].mxu0
    %v333 = vadd.f32 0.0, %v332
    %v334 = vpop.f32.mrb[0].mxu0
    %v335 = vadd.f32 0.0, %v334
    %v336 = vpop.f32.mrb[0].mxu0
    %v337 = vadd.f32 0.0, %v336
    %v338 = vpop.f32.mrb[0].mxu0
    %v339 = vadd.f32 0.0, %v338
    %340 = vdwg.mxu0
    %341 = vmatprep.subr.bf16.mxu0 0
    %342 = vmatpush1.bf16.msra.mxu0 %v252
    %343 = vmatprep.subr.bf16.mxu0 0
    %344 = vmatpush1.bf16.msra.mxu0 %v255
    %345 = vmatprep.subr.bf16.mxu0 0
    %346 = vmatpush1.bf16.msra.mxu0 %v258
    %347 = vmatprep.subr.bf16.mxu0 0
    %348 = vmatpush1.bf16.msra.mxu0 %v261
    %349 = vmatprep.subr.bf16.mxu0 0
    %350 = vmatpush1.bf16.msra.mxu0 %v264
    %351 = vmatprep.subr.bf16.mxu0 0
    %352 = vmatpush1.bf16.msra.mxu0 %v267
    %353 = vmatprep.subr.bf16.mxu0 0
    %354 = vmatpush1.bf16.msra.mxu0 %v270
    %355 = vmatprep.subr.bf16.mxu0 0
    %356 = vmatpush1.bf16.msra.mxu0 %v273
    %357 = vmatprep.subr.bf16.mxu0 0
    %358 = vmatpush1.bf16.msra.mxu0 0
    %359 = vmatprep.subr.bf16.mxu0 0
    %360 = vmatpush1.bf16.msra.mxu0 0
    %361 = vmatprep.subr.bf16.mxu0 0
    %362 = vmatpush1.bf16.msra.mxu0 0
    %363 = vmatprep.subr.bf16.mxu0 0
    %364 = vmatpush1.bf16.msra.mxu0 0
    %365 = vmatprep.subr.bf16.mxu0 0
    %366 = vmatpush1.bf16.msra.mxu0 0
    %367 = vmatprep.subr.bf16.mxu0 0
    %368 = vmatpush1.bf16.msra.mxu0 0
    %369 = vmatprep.subr.bf16.mxu0 0
    %370 = vmatpush1.bf16.msra.mxu0 0
    %371 = vmatprep.subr.bf16.mxu0 0
    %372 = vmatpush1.bf16.msra.mxu0 0
    %373 = vmatprep.mubr.bf16.mxu0 0
    %374 = vmatmul.mubr.bf16.gmra.mrb[0].mxu0 %v168
    %v375 = vpop.f32.mrb[0].mxu0
    %v376 = vadd.f32 0.0, %v375
    %v377 = vpop.f32.mrb[0].mxu0
    %v378 = vpop.f32.mrb[0].mxu0
    %v379 = vadd.f32 0.0, %v378
    %v380 = vpop.f32.mrb[0].mxu0
    %381 = vdwg.mxu0
    %v382 = vld [vmem:[#allocation11] sm:$0xff]
    %v383 = vld [vmem:[#allocation11 + $0x8] sm:$0xff]
    %v384 = vld [vmem:[#allocation11 + $0x10] sm:$0xff]
    %v385 = vld [vmem:[#allocation11 + $0x18] sm:$0xff]
    %v386 = vld [vmem:[#allocation11 + $0x20] sm:$0xff]
    %v387 = vld [vmem:[#allocation11 + $0x28] sm:$0xff]
    %v388 = vld [vmem:[#allocation11 + $0x30] sm:$0xff]
    %v389 = vld [vmem:[#allocation11 + $0x38] sm:$0xff]
    %v390 = vld [vmem:[#allocation11 + $0x40] sm:$0xff]
    %v391 = vld [vmem:[#allocation11 + $0x48] sm:$0xff]
    %v392 = vld [vmem:[#allocation11 + $0x50] sm:$0xff]
    %v393 = vld [vmem:[#allocation11 + $0x58] sm:$0xff]
    %v394 = vld [vmem:[#allocation11 + $0x60] sm:$0xff]
    %v395 = vld [vmem:[#allocation11 + $0x68] sm:$0xff]
    %v396 = vld [vmem:[#allocation11 + $0x70] sm:$0xff]
    %v397 = vld [vmem:[#allocation11 + $0x78] sm:$0xff]
    %v400 = vunpack.c.l.b16 %v128
    %v401 = vunpack.c.l.b16 %v129
    %v402 = vpack.c.b16 %v401, %v400
    %v420 = vunpack.c.l.b16 %v382
    %v421 = vunpack.c.h.b16 %v382
    %v422 = vunpack.c.l.b16 %v383
    %v423 = vunpack.c.h.b16 %v383
    %v424 = vunpack.c.l.b16 %v384
    %v425 = vunpack.c.h.b16 %v384
    %v426 = vunpack.c.l.b16 %v385
    %v427 = vunpack.c.h.b16 %v385
    %v428 = vunpack.c.l.b16 %v386
    %v429 = vunpack.c.h.b16 %v386
    %v430 = vunpack.c.l.b16 %v387
    %v431 = vunpack.c.h.b16 %v387
    %v432 = vunpack.c.l.b16 %v388
    %v433 = vunpack.c.h.b16 %v388
    %v434 = vunpack.c.l.b16 %v389
    %v435 = vunpack.c.h.b16 %v389
    %v436 = vunpack.c.l.b16 %v390
    %v437 = vunpack.c.h.b16 %v390
    %v438 = vunpack.c.l.b16 %v391
    %v439 = vunpack.c.h.b16 %v391
    %v440 = vunpack.c.l.b16 %v392
    %v441 = vunpack.c.h.b16 %v392
    %v442 = vunpack.c.l.b16 %v393
    %v443 = vunpack.c.h.b16 %v393
    %v444 = vunpack.c.l.b16 %v394
    %v445 = vunpack.c.h.b16 %v394
    %v446 = vunpack.c.l.b16 %v395
    %v447 = vunpack.c.h.b16 %v395
    %v448 = vunpack.c.l.b16 %v396
    %v449 = vunpack.c.h.b16 %v396
    %v450 = vunpack.c.l.b16 %v397
    %v451 = vunpack.c.h.b16 %v397
    %v452 = vpack.c.b16 %v422, %v420
    %v453 = vpack.c.b16 %v423, %v421
    %v454 = vpack.c.b16 %v426, %v424
    %v455 = vpack.c.b16 %v427, %v425
    %v456 = vpack.c.b16 %v430, %v428
    %v457 = vpack.c.b16 %v431, %v429
    %v458 = vpack.c.b16 %v434, %v432
    %v459 = vpack.c.b16 %v435, %v433
    %v460 = vpack.c.b16 %v438, %v436
    %v461 = vpack.c.b16 %v439, %v437
    %v462 = vpack.c.b16 %v442, %v440
    %v463 = vpack.c.b16 %v443, %v441
    %v464 = vpack.c.b16 %v446, %v444
    %v465 = vpack.c.b16 %v447, %v445
    %v466 = vpack.c.b16 %v450, %v448
    %v467 = vpack.c.b16 %v451, %v449
    %484 = vmatprep.subr.bf16.mxu0 %v453
    %485 = vmatpush1.bf16.msra.mxu0 %v452
    %486 = vmatprep.subr.bf16.mxu0 %v455
    %487 = vmatpush1.bf16.msra.mxu0 %v454
    %488 = vmatprep.subr.bf16.mxu0 %v457
    %489 = vmatpush1.bf16.msra.mxu0 %v456
    %490 = vmatprep.subr.bf16.mxu0 %v459
    %491 = vmatpush1.bf16.msra.mxu0 %v458
    %492 = vmatprep.subr.bf16.mxu0 %v461
    %493 = vmatpush1.bf16.msra.mxu0 %v460
    %494 = vmatprep.subr.bf16.mxu0 %v463
    %495 = vmatpush1.bf16.msra.mxu0 %v462
    %496 = vmatprep.subr.bf16.mxu0 %v465
    %497 = vmatpush1.bf16.msra.mxu0 %v464
    %498 = vmatprep.subr.bf16.mxu0 %v467
    %499 = vmatpush1.bf16.msra.mxu0 %v466
    %500 = vmatprep.subr.bf16.mxu0 0
    %501 = vmatpush1.bf16.msra.mxu0 0
    %502 = vmatprep.subr.bf16.mxu0 0
    %503 = vmatpush1.bf16.msra.mxu0 0
    %504 = vmatprep.subr.bf16.mxu0 0
    %505 = vmatpush1.bf16.msra.mxu0 0
    %506 = vmatprep.subr.bf16.mxu0 0
    %507 = vmatpush1.bf16.msra.mxu0 0
    %508 = vmatprep.subr.bf16.mxu0 0
    %509 = vmatpush1.bf16.msra.mxu0 0
    %510 = vmatprep.subr.bf16.mxu0 0
    %511 = vmatpush1.bf16.msra.mxu0 0
    %512 = vmatprep.subr.bf16.mxu0 0
    %513 = vmatpush1.bf16.msra.mxu0 0
    %514 = vmatprep.subr.bf16.mxu0 0
    %515 = vmatpush1.bf16.msra.mxu0 0
    %516 = vmatprep.mubr.bf16.mxu0 0
    %517 = vmatmul.mubr.bf16.gmra.mrb[0].mxu0 %v402
    %v518 = vpop.f32.mrb[0].mxu0
    %v519 = vadd.f32 0.0, %v518
    %v520 = vpop.f32.mrb[0].mxu0
    %v521 = vadd.f32 0.0, %v520
    %v522 = vpop.f32.mrb[0].mxu0
    %v523 = vadd.f32 0.0, %v522
    %v524 = vpop.f32.mrb[0].mxu0
    %v525 = vadd.f32 0.0, %v524
    %526 = vdwg.mxu0
    %v527 = vadd.f32 %v333, %v519
    %v528 = vadd.f32 %v335, %v521
    %v529 = vadd.f32 %v337, %v523
    %v530 = vadd.f32 %v339, %v525
    %v531 = vld [vmem:[#allocation12] sm:$0xff]
    %v532 = vld [vmem:[#allocation12 + $0x8] sm:$0xff]
    %v533 = vld [vmem:[#allocation12 + $0x10] sm:$0xff]
    %v534 = vld [vmem:[#allocation12 + $0x18] sm:$0xff]
    %v535 = vld [vmem:[#allocation12 + $0x20] sm:$0xff]
    %v536 = vld [vmem:[#allocation12 + $0x28] sm:$0xff]
    %v537 = vld [vmem:[#allocation12 + $0x30] sm:$0xff]
    %v538 = vld [vmem:[#allocation12 + $0x38] sm:$0xff]
    %v539 = vld [vmem:[#allocation12 + $0x40] sm:$0xff]
    %v540 = vld [vmem:[#allocation12 + $0x48] sm:$0xff]
    %v541 = vld [vmem:[#allocation12 + $0x50] sm:$0xff]
    %v542 = vld [vmem:[#allocation12 + $0x58] sm:$0xff]
    %v543 = vld [vmem:[#allocation12 + $0x60] sm:$0xff]
    %v544 = vld [vmem:[#allocation12 + $0x68] sm:$0xff]
    %v545 = vld [vmem:[#allocation12 + $0x70] sm:$0xff]
    %v546 = vld [vmem:[#allocation12 + $0x78] sm:$0xff]
    %v549 = vunpack.c.l.b16 %v130
    %v550 = vunpack.c.l.b16 %v131
    %v551 = vpack.c.b16 %v550, %v549
    %v569 = vunpack.c.l.b16 %v531
    %v570 = vunpack.c.h.b16 %v531
    %v571 = vunpack.c.l.b16 %v532
    %v572 = vunpack.c.h.b16 %v532
    %v573 = vunpack.c.l.b16 %v533
    %v574 = vunpack.c.h.b16 %v533
    %v575 = vunpack.c.l.b16 %v534
    %v576 = vunpack.c.h.b16 %v534
    %v577 = vunpack.c.l.b16 %v535
    %v578 = vunpack.c.h.b16 %v535
    %v579 = vunpack.c.l.b16 %v536
    %v580 = vunpack.c.h.b16 %v536
    %v581 = vunpack.c.l.b16 %v537
    %v582 = vunpack.c.h.b16 %v537
    %v583 = vunpack.c.l.b16 %v538
    %v584 = vunpack.c.h.b16 %v538
    %v585 = vunpack.c.l.b16 %v539
    %v586 = vunpack.c.h.b16 %v539
    %v587 = vunpack.c.l.b16 %v540
    %v588 = vunpack.c.h.b16 %v540
    %v589 = vunpack.c.l.b16 %v541
    %v590 = vunpack.c.h.b16 %v541
    %v591 = vunpack.c.l.b16 %v542
    %v592 = vunpack.c.h.b16 %v542
    %v593 = vunpack.c.l.b16 %v543
    %v594 = vunpack.c.h.b16 %v543
    %v595 = vunpack.c.l.b16 %v544
    %v596 = vunpack.c.h.b16 %v544
    %v597 = vunpack.c.l.b16 %v545
    %v598 = vunpack.c.h.b16 %v545
    %v599 = vunpack.c.l.b16 %v546
    %v600 = vunpack.c.h.b16 %v546
    %v601 = vpack.c.b16 %v571, %v569
    %v602 = vpack.c.b16 %v572, %v570
    %v603 = vpack.c.b16 %v575, %v573
    %v604 = vpack.c.b16 %v576, %v574
    %v605 = vpack.c.b16 %v579, %v577
    %v606 = vpack.c.b16 %v580, %v578
    %v607 = vpack.c.b16 %v583, %v581
    %v608 = vpack.c.b16 %v584, %v582
    %v609 = vpack.c.b16 %v587, %v585
    %v610 = vpack.c.b16 %v588, %v586
    %v611 = vpack.c.b16 %v591, %v589
    %v612 = vpack.c.b16 %v592, %v590
    %v613 = vpack.c.b16 %v595, %v593
    %v614 = vpack.c.b16 %v596, %v594
    %v615 = vpack.c.b16 %v599, %v597
    %v616 = vpack.c.b16 %v600, %v598
    %633 = vmatprep.subr.bf16.mxu0 %v602
    %634 = vmatpush1.bf16.msra.mxu0 %v601
    %635 = vmatprep.subr.bf16.mxu0 %v604
    %636 = vmatpush1.bf16.msra.mxu0 %v603
    %637 = vmatprep.subr.bf16.mxu0 %v606
    %638 = vmatpush1.bf16.msra.mxu0 %v605
    %639 = vmatprep.subr.bf16.mxu0 %v608
    %640 = vmatpush1.bf16.msra.mxu0 %v607
    %641 = vmatprep.subr.bf16.mxu0 %v610
    %642 = vmatpush1.bf16.msra.mxu0 %v609
    %643 = vmatprep.subr.bf16.mxu0 %v612
    %644 = vmatpush1.bf16.msra.mxu0 %v611
    %645 = vmatprep.subr.bf16.mxu0 %v614
    %646 = vmatpush1.bf16.msra.mxu0 %v613
    %647 = vmatprep.subr.bf16.mxu0 %v616
    %648 = vmatpush1.bf16.msra.mxu0 %v615
    %649 = vmatprep.subr.bf16.mxu0 0
    %650 = vmatpush1.bf16.msra.mxu0 0
    %651 = vmatprep.subr.bf16.mxu0 0
    %652 = vmatpush1.bf16.msra.mxu0 0
    %653 = vmatprep.subr.bf16.mxu0 0
    %654 = vmatpush1.bf16.msra.mxu0 0
    %655 = vmatprep.subr.bf16.mxu0 0
    %656 = vmatpush1.bf16.msra.mxu0 0
    %657 = vmatprep.subr.bf16.mxu0 0
    %658 = vmatpush1.bf16.msra.mxu0 0
    %659 = vmatprep.subr.bf16.mxu0 0
    %660 = vmatpush1.bf16.msra.mxu0 0
    %661 = vmatprep.subr.bf16.mxu0 0
    %662 = vmatpush1.bf16.msra.mxu0 0
    %663 = vmatprep.subr.bf16.mxu0 0
    %664 = vmatpush1.bf16.msra.mxu0 0
    %665 = vmatprep.mubr.bf16.mxu0 0
    %666 = vmatmul.mubr.bf16.gmra.mrb[0].mxu0 %v551
    %v667 = vpop.f32.mrb[0].mxu0
    %v668 = vadd.f32 0.0, %v667
    %v669 = vpop.f32.mrb[0].mxu0
    %v670 = vadd.f32 0.0, %v669
    %v671 = vpop.f32.mrb[0].mxu0
    %v672 = vadd.f32 0.0, %v671
    %v673 = vpop.f32.mrb[0].mxu0
    %v674 = vadd.f32 0.0, %v673
    %675 = vdwg.mxu0
    %v676 = vadd.f32 %v527, %v668
    %v677 = vadd.f32 %v528, %v670
    %v678 = vadd.f32 %v529, %v672
    %v679 = vadd.f32 %v530, %v674
    %v680 = vpack.c.bf16 %v676, %v676
    %v681 = vpack.c.bf16 %v678, %v678
    %v682 = vpack.c.bf16 %v677, %v677
    %v683 = vpack.c.bf16 %v679, %v679
    %v684 = vpack.c.bf16 %v376, %v376
    %v685 = vpack.c.bf16 %v379, %v379
    %vm686 = vcmask 523264
    %v688 = vsel %vm686, %v680, 0
    %v691 = vsel %vm686, %v682, 0
    %693 = vmatprep.subr.bf16.mxu0 0
    %694 = vmatpush1.bf16.xpose.msra.mxu0 %v691
    %695 = vmatprep.subr.bf16.mxu0 0
    %696 = vmatpush1.bf16.xpose.msra.mxu0 0
    %697 = vmatprep.subr.bf16.mxu0 0
    %698 = vmatpush1.bf16.xpose.msra.mxu0 0
    %699 = vmatprep.subr.bf16.mxu0 0
    %700 = vmatpush1.bf16.xpose.msra.mxu0 0
    %701 = vmatprep.subr.bf16.mxu0 0
    %702 = vmatpush1.bf16.xpose.msra.mxu0 0
    %703 = vmatprep.subr.bf16.mxu0 0
    %704 = vmatpush1.bf16.xpose.msra.mxu0 0
    %705 = vmatprep.subr.bf16.mxu0 0
    %706 = vmatpush1.bf16.xpose.msra.mxu0 0
    %707 = vmatprep.subr.bf16.mxu0 0
    %708 = vmatpush1.bf16.xpose.msra.mxu0 0
    %709 = vmatprep.subr.bf16.mxu0 0
    %710 = vmatpush1.bf16.xpose.msra.mxu0 0
    %711 = vmatprep.subr.bf16.mxu0 0
    %712 = vmatpush1.bf16.xpose.msra.mxu0 0
    %713 = vmatprep.subr.bf16.mxu0 0
    %714 = vmatpush1.bf16.xpose.msra.mxu0 0
    %715 = vmatprep.subr.bf16.mxu0 0
    %716 = vmatpush1.bf16.xpose.msra.mxu0 0
    %717 = vmatprep.subr.bf16.mxu0 0
    %718 = vmatpush1.bf16.xpose.msra.mxu0 0
    %719 = vmatprep.subr.bf16.mxu0 0
    %720 = vmatpush1.bf16.xpose.msra.mxu0 0
    %721 = vmatprep.subr.bf16.mxu0 0
    %722 = vmatpush1.bf16.xpose.msra.mxu0 0
    %723 = vmatprep.subr.bf16.mxu0 0
    %724 = vmatpush1.bf16.xpose.msra.mxu0 0
    %725 = vmatprep.mubr.bf16.mxu0 0
    %726 = vmatmul.mubr.bf16.gmra.mrb[0].mxu0 %v688
    %v727 = vpop.f32.mrb[0].mxu0
    %v728 = vadd.f32 0.0, %v727
    %v729 = vpop.f32.mrb[0].mxu0
    %v730 = vpop.f32.mrb[0].mxu0
    %v731 = vpop.f32.mrb[0].mxu0
    %732 = vdwg.mxu0
    %v734 = vsel %vm686, %v681, 0
    %v737 = vsel %vm686, %v683, 0
    %739 = vmatprep.subr.bf16.mxu0 0
    %740 = vmatpush1.bf16.xpose.msra.mxu0 %v737
    %741 = vmatprep.subr.bf16.mxu0 0
    %742 = vmatpush1.bf16.xpose.msra.mxu0 0
    %743 = vmatprep.subr.bf16.mxu0 0
    %744 = vmatpush1.bf16.xpose.msra.mxu0 0
    %745 = vmatprep.subr.bf16.mxu0 0
    %746 = vmatpush1.bf16.xpose.msra.mxu0 0
    %747 = vmatprep.subr.bf16.mxu0 0
    %748 = vmatpush1.bf16.xpose.msra.mxu0 0
    %749 = vmatprep.subr.bf16.mxu0 0
    %750 = vmatpush1.bf16.xpose.msra.mxu0 0
    %751 = vmatprep.subr.bf16.mxu0 0
    %752 = vmatpush1.bf16.xpose.msra.mxu0 0
    %753 = vmatprep.subr.bf16.mxu0 0
    %754 = vmatpush1.bf16.xpose.msra.mxu0 0
    %755 = vmatprep.subr.bf16.mxu0 0
    %756 = vmatpush1.bf16.xpose.msra.mxu0 0
    %757 = vmatprep.subr.bf16.mxu0 0
    %758 = vmatpush1.bf16.xpose.msra.mxu0 0
    %759 = vmatprep.subr.bf16.mxu0 0
    %760 = vmatpush1.bf16.xpose.msra.mxu0 0
    %761 = vmatprep.subr.bf16.mxu0 0
    %762 = vmatpush1.bf16.xpose.msra.mxu0 0
    %763 = vmatprep.subr.bf16.mxu0 0
    %764 = vmatpush1.bf16.xpose.msra.mxu0 0
    %765 = vmatprep.subr.bf16.mxu0 0
    %766 = vmatpush1.bf16.xpose.msra.mxu0 0
    %767 = vmatprep.subr.bf16.mxu0 0
    %768 = vmatpush1.bf16.xpose.msra.mxu0 0
    %769 = vmatprep.subr.bf16.mxu0 0
    %770 = vmatpush1.bf16.xpose.msra.mxu0 0
    %771 = vmatprep.mubr.bf16.mxu0 0
    %772 = vmatmul.mubr.bf16.gmra.mrb[0].mxu0 %v734
    %v773 = vpop.f32.mrb[0].mxu0
    %v774 = vadd.f32 0.0, %v773
    %v775 = vpop.f32.mrb[0].mxu0
    %v776 = vpop.f32.mrb[0].mxu0
    %v777 = vpop.f32.mrb[0].mxu0
    %778 = vdwg.mxu0
    %vm779 = vcmask 64512
    %v780 = vsel %vm779, %v728, -inf
    %781 = vmax.xlane.f32.xlu0 %v780
    %v782 = vpop.xlane.xlu0 %781
    %v783 = vsel %vm779, %v774, -inf
    %784 = vmax.xlane.f32.xlu0 %v783
    %v785 = vpop.xlane.xlu0 %784
    %v786 = vsub.f32 %v728, %v782
    %v787 = vsub.f32 %v774, %v785
    %v788 = vmul.f32 %v786, 1.442695
    %v789 = vpow.pop %v788
    %v790 = vmul.f32 %v787, 1.442695
    %v791 = vpow.pop %v790
    %v792 = vsel %vm779, %v789, 0.0
    %793 = vadd.xlane.f32.xlu0 %v792
    %v794 = vpop.xlane.xlu0 %793
    %v795 = vsel %vm779, %v791, 0.0
    %796 = vadd.xlane.f32.xlu0 %v795
    %v797 = vpop.xlane.xlu0 %796
    %v798 = vpack.c.bf16 %v789, %v789
    %v799 = vpack.c.bf16 %v791, %v791
    %v801 = vsel %vm779, %v798, 0
    %vm803 = vcmask 1043456
    %v805 = vsel %vm803, %v684, 0
    %807 = vmatprep.subr.bf16.mxu0 0
    %808 = vmatpush1.bf16.msra.mxu0 %v805
    %809 = vmatprep.subr.bf16.mxu0 0
    %810 = vmatpush1.bf16.msra.mxu0 0
    %811 = vmatprep.subr.bf16.mxu0 0
    %812 = vmatpush1.bf16.msra.mxu0 0
    %813 = vmatprep.subr.bf16.mxu0 0
    %814 = vmatpush1.bf16.msra.mxu0 0
    %815 = vmatprep.subr.bf16.mxu0 0
    %816 = vmatpush1.bf16.msra.mxu0 0
    %817 = vmatprep.subr.bf16.mxu0 0
    %818 = vmatpush1.bf16.msra.mxu0 0
    %819 = vmatprep.subr.bf16.mxu0 0
    %820 = vmatpush1.bf16.msra.mxu0 0
    %821 = vmatprep.subr.bf16.mxu0 0
    %822 = vmatpush1.bf16.msra.mxu0 0
    %823 = vmatprep.subr.bf16.mxu0 0
    %824 = vmatpush1.bf16.msra.mxu0 0
    %825 = vmatprep.subr.bf16.mxu0 0
    %826 = vmatpush1.bf16.msra.mxu0 0
    %827 = vmatprep.subr.bf16.mxu0 0
    %828 = vmatpush1.bf16.msra.mxu0 0
    %829 = vmatprep.subr.bf16.mxu0 0
    %830 = vmatpush1.bf16.msra.mxu0 0
    %831 = vmatprep.subr.bf16.mxu0 0
    %832 = vmatpush1.bf16.msra.mxu0 0
    %833 = vmatprep.subr.bf16.mxu0 0
    %834 = vmatpush1.bf16.msra.mxu0 0
    %835 = vmatprep.subr.bf16.mxu0 0
    %836 = vmatpush1.bf16.msra.mxu0 0
    %837 = vmatprep.subr.bf16.mxu0 0
    %838 = vmatpush1.bf16.msra.mxu0 0
    %839 = vmatprep.mubr.bf16.mxu0 0
    %840 = vmatmul.mubr.bf16.gmra.mrb[0].mxu0 %v801
    %v841 = vpop.f32.mrb[0].mxu0
    %v842 = vadd.f32 0.0, %v841
    %v843 = vpop.f32.mrb[0].mxu0
    %v844 = vpop.f32.mrb[0].mxu0
    %v845 = vpop.f32.mrb[0].mxu0
    %846 = vdwg.mxu0
    %v848 = vsel %vm779, %v799, 0
    %v851 = vsel %vm803, %v685, 0
    %853 = vmatprep.subr.bf16.mxu0 0
    %854 = vmatpush1.bf16.msra.mxu0 %v851
    %855 = vmatprep.subr.bf16.mxu0 0
    %856 = vmatpush1.bf16.msra.mxu0 0
    %857 = vmatprep.subr.bf16.mxu0 0
    %858 = vmatpush1.bf16.msra.mxu0 0
    %859 = vmatprep.subr.bf16.mxu0 0
    %860 = vmatpush1.bf16.msra.mxu0 0
    %861 = vmatprep.subr.bf16.mxu0 0
    %862 = vmatpush1.bf16.msra.mxu0 0
    %863 = vmatprep.subr.bf16.mxu0 0
    %864 = vmatpush1.bf16.msra.mxu0 0
    %865 = vmatprep.subr.bf16.mxu0 0
    %866 = vmatpush1.bf16.msra.mxu0 0
    %867 = vmatprep.subr.bf16.mxu0 0
    %868 = vmatpush1.bf16.msra.mxu0 0
    %869 = vmatprep.subr.bf16.mxu0 0
    %870 = vmatpush1.bf16.msra.mxu0 0
    %871 = vmatprep.subr.bf16.mxu0 0
    %872 = vmatpush1.bf16.msra.mxu0 0
    %873 = vmatprep.subr.bf16.mxu0 0
    %874 = vmatpush1.bf16.msra.mxu0 0
    %875 = vmatprep.subr.bf16.mxu0 0
    %876 = vmatpush1.bf16.msra.mxu0 0
    %877 = vmatprep.subr.bf16.mxu0 0
    %878 = vmatpush1.bf16.msra.mxu0 0
    %879 = vmatprep.subr.bf16.mxu0 0
    %880 = vmatpush1.bf16.msra.mxu0 0
    %881 = vmatprep.subr.bf16.mxu0 0
    %882 = vmatpush1.bf16.msra.mxu0 0
    %883 = vmatprep.subr.bf16.mxu0 0
    %884 = vmatpush1.bf16.msra.mxu0 0
    %885 = vmatprep.mubr.bf16.mxu0 0
    %886 = vmatmul.mubr.bf16.gmra.mrb[0].mxu0 %v848
    %v887 = vpop.f32.mrb[0].mxu0
    %v888 = vadd.f32 0.0, %v887
    %v889 = vpop.f32.mrb[0].mxu0
    %v890 = vpop.f32.mrb[0].mxu0
    %v891 = vpop.f32.mrb[0].mxu0
    %892 = vdwg.mxu0
    %v893 = vrcp.pop %v794
    %v894 = vrcp.pop %v797
    %v895 = vmul.f32 %v842, %v893
    %v896 = vmul.f32 %v888, %v894
    %v897 = vpack.c.bf16 %v896, %v895
    %898 = vst.msk [vmem:[#allocation2] sm:$0xff] %vm686, %v897
    %900 = vrot.lane.b32.xlu0 %v680, 64
    %v901 = vpop.permute.xlu0 %900
    %903 = vrot.lane.b32.xlu0 %v682, 64
    %v904 = vpop.permute.xlu0 %903
    %v906 = vsel %vm686, %v901, 0
    %v909 = vsel %vm686, %v904, 0
    %911 = vmatprep.subr.bf16.mxu0 0
    %912 = vmatpush1.bf16.xpose.msra.mxu0 %v909
    %913 = vmatprep.subr.bf16.mxu0 0
    %914 = vmatpush1.bf16.xpose.msra.mxu0 0
    %915 = vmatprep.subr.bf16.mxu0 0
    %916 = vmatpush1.bf16.xpose.msra.mxu0 0
    %917 = vmatprep.subr.bf16.mxu0 0
    %918 = vmatpush1.bf16.xpose.msra.mxu0 0
    %919 = vmatprep.subr.bf16.mxu0 0
    %920 = vmatpush1.bf16.xpose.msra.mxu0 0
    %921 = vmatprep.subr.bf16.mxu0 0
    %922 = vmatpush1.bf16.xpose.msra.mxu0 0
    %923 = vmatprep.subr.bf16.mxu0 0
    %924 = vmatpush1.bf16.xpose.msra.mxu0 0
    %925 = vmatprep.subr.bf16.mxu0 0
    %926 = vmatpush1.bf16.xpose.msra.mxu0 0
    %927 = vmatprep.subr.bf16.mxu0 0
    %928 = vmatpush1.bf16.xpose.msra.mxu0 0
    %929 = vmatprep.subr.bf16.mxu0 0
    %930 = vmatpush1.bf16.xpose.msra.mxu0 0
    %931 = vmatprep.subr.bf16.mxu0 0
    %932 = vmatpush1.bf16.xpose.msra.mxu0 0
    %933 = vmatprep.subr.bf16.mxu0 0
    %934 = vmatpush1.bf16.xpose.msra.mxu0 0
    %935 = vmatprep.subr.bf16.mxu0 0
    %936 = vmatpush1.bf16.xpose.msra.mxu0 0
    %937 = vmatprep.subr.bf16.mxu0 0
    %938 = vmatpush1.bf16.xpose.msra.mxu0 0
    %939 = vmatprep.subr.bf16.mxu0 0
    %940 = vmatpush1.bf16.xpose.msra.mxu0 0
    %941 = vmatprep.subr.bf16.mxu0 0
    %942 = vmatpush1.bf16.xpose.msra.mxu0 0
    %943 = vmatprep.mubr.bf16.mxu0 0
    %944 = vmatmul.mubr.bf16.gmra.mrb[0].mxu0 %v906
    %v945 = vpop.f32.mrb[0].mxu0
    %v946 = vadd.f32 0.0, %v945
    %v947 = vpop.f32.mrb[0].mxu0
    %v948 = vpop.f32.mrb[0].mxu0
    %v949 = vpop.f32.mrb[0].mxu0
    %950 = vdwg.mxu0
    %952 = vrot.lane.b32.xlu0 %v681, 64
    %v953 = vpop.permute.xlu0 %952
    %955 = vrot.lane.b32.xlu0 %v683, 64
    %v956 = vpop.permute.xlu0 %955
    %v958 = vsel %vm686, %v953, 0
    %v961 = vsel %vm686, %v956, 0
    %963 = vmatprep.subr.bf16.mxu0 0
    %964 = vmatpush1.bf16.xpose.msra.mxu0 %v961
    %965 = vmatprep.subr.bf16.mxu0 0
    %966 = vmatpush1.bf16.xpose.msra.mxu0 0
    %967 = vmatprep.subr.bf16.mxu0 0
    %968 = vmatpush1.bf16.xpose.msra.mxu0 0
    %969 = vmatprep.subr.bf16.mxu0 0
    %970 = vmatpush1.bf16.xpose.msra.mxu0 0
    %971 = vmatprep.subr.bf16.mxu0 0
    %972 = vmatpush1.bf16.xpose.msra.mxu0 0
    %973 = vmatprep.subr.bf16.mxu0 0
    %974 = vmatpush1.bf16.xpose.msra.mxu0 0
    %975 = vmatprep.subr.bf16.mxu0 0
    %976 = vmatpush1.bf16.xpose.msra.mxu0 0
    %977 = vmatprep.subr.bf16.mxu0 0
    %978 = vmatpush1.bf16.xpose.msra.mxu0 0
    %979 = vmatprep.subr.bf16.mxu0 0
    %980 = vmatpush1.bf16.xpose.msra.mxu0 0
    %981 = vmatprep.subr.bf16.mxu0 0
    %982 = vmatpush1.bf16.xpose.msra.mxu0 0
    %983 = vmatprep.subr.bf16.mxu0 0
    %984 = vmatpush1.bf16.xpose.msra.mxu0 0
    %985 = vmatprep.subr.bf16.mxu0 0
    %986 = vmatpush1.bf16.xpose.msra.mxu0 0
    %987 = vmatprep.subr.bf16.mxu0 0
    %988 = vmatpush1.bf16.xpose.msra.mxu0 0
    %989 = vmatprep.subr.bf16.mxu0 0
    %990 = vmatpush1.bf16.xpose.msra.mxu0 0
    %991 = vmatprep.subr.bf16.mxu0 0
    %992 = vmatpush1.bf16.xpose.msra.mxu0 0
    %993 = vmatprep.subr.bf16.mxu0 0
    %994 = vmatpush1.bf16.xpose.msra.mxu0 0
    %995 = vmatprep.mubr.bf16.mxu0 0
    %996 = vmatmul.mubr.bf16.gmra.mrb[0].mxu0 %v958
    %v997 = vpop.f32.mrb[0].mxu0
    %v998 = vadd.f32 0.0, %v997
    %v999 = vpop.f32.mrb[0].mxu0
    %v1000 = vpop.f32.mrb[0].mxu0
    %v1001 = vpop.f32.mrb[0].mxu0
    %1002 = vdwg.mxu0
    %v1003 = vsel %vm779, %v946, -inf
    %1004 = vmax.xlane.f32.xlu0 %v1003
    %v1005 = vpop.xlane.xlu0 %1004
    %v1006 = vsel %vm779, %v998, -inf
    %1007 = vmax.xlane.f32.xlu0 %v1006
    %v1008 = vpop.xlane.xlu0 %1007
    %v1009 = vsub.f32 %v946, %v1005
    %v1010 = vsub.f32 %v998, %v1008
    %v1011 = vmul.f32 %v1009, 1.442695
    %v1012 = vpow.pop %v1011
    %v1013 = vmul.f32 %v1010, 1.442695
    %v1014 = vpow.pop %v1013
    %v1015 = vsel %vm779, %v1012, 0.0
    %1016 = vadd.xlane.f32.xlu0 %v1015
    %v1017 = vpop.xlane.xlu0 %1016
    %v1018 = vsel %vm779, %v1014, 0.0
    %1019 = vadd.xlane.f32.xlu0 %v1018
    %v1020 = vpop.xlane.xlu0 %1019
    %v1021 = vpack.c.bf16 %v1012, %v1012
    %v1022 = vpack.c.bf16 %v1014, %v1014
    %1024 = vrot.lane.b32.xlu0 %v684, 64
    %v1025 = vpop.permute.xlu0 %1024
    %v1027 = vsel %vm779, %v1021, 0
    %v1030 = vsel %vm803, %v1025, 0
    %1032 = vmatprep.subr.bf16.mxu0 0
    %1033 = vmatpush1.bf16.msra.mxu0 %v1030
    %1034 = vmatprep.subr.bf16.mxu0 0
    %1035 = vmatpush1.bf16.msra.mxu0 0
    %1036 = vmatprep.subr.bf16.mxu0 0
    %1037 = vmatpush1.bf16.msra.mxu0 0
    %1038 = vmatprep.subr.bf16.mxu0 0
    %1039 = vmatpush1.bf16.msra.mxu0 0
    %1040 = vmatprep.subr.bf16.mxu0 0
    %1041 = vmatpush1.bf16.msra.mxu0 0
    %1042 = vmatprep.subr.bf16.mxu0 0
    %1043 = vmatpush1.bf16.msra.mxu0 0
    %1044 = vmatprep.subr.bf16.mxu0 0
    %1045 = vmatpush1.bf16.msra.mxu0 0
    %1046 = vmatprep.subr.bf16.mxu0 0
    %1047 = vmatpush1.bf16.msra.mxu0 0
    %1048 = vmatprep.subr.bf16.mxu0 0
    %1049 = vmatpush1.bf16.msra.mxu0 0
    %1050 = vmatprep.subr.bf16.mxu0 0
    %1051 = vmatpush1.bf16.msra.mxu0 0
    %1052 = vmatprep.subr.bf16.mxu0 0
    %1053 = vmatpush1.bf16.msra.mxu0 0
    %1054 = vmatprep.subr.bf16.mxu0 0
    %1055 = vmatpush1.bf16.msra.mxu0 0
    %1056 = vmatprep.subr.bf16.mxu0 0
    %1057 = vmatpush1.bf16.msra.mxu0 0
    %1058 = vmatprep.subr.bf16.mxu0 0
    %1059 = vmatpush1.bf16.msra.mxu0 0
    %1060 = vmatprep.subr.bf16.mxu0 0
    %1061 = vmatpush1.bf16.msra.mxu0 0
    %1062 = vmatprep.subr.bf16.mxu0 0
    %1063 = vmatpush1.bf16.msra.mxu0 0
    %1064 = vmatprep.mubr.bf16.mxu0 0
    %1065 = vmatmul.mubr.bf16.gmra.mrb[0].mxu0 %v1027
    %v1066 = vpop.f32.mrb[0].mxu0
    %v1067 = vadd.f32 0.0, %v1066
    %v1068 = vpop.f32.mrb[0].mxu0
    %v1069 = vpop.f32.mrb[0].mxu0
    %v1070 = vpop.f32.mrb[0].mxu0
    %1071 = vdwg.mxu0
    %1073 = vrot.lane.b32.xlu0 %v685, 64
    %v1074 = vpop.permute.xlu0 %1073
    %v1076 = vsel %vm779, %v1022, 0
    %v1079 = vsel %vm803, %v1074, 0
    %1081 = vmatprep.subr.bf16.mxu0 0
    %1082 = vmatpush1.bf16.msra.mxu0 %v1079
    %1083 = vmatprep.subr.bf16.mxu0 0
    %1084 = vmatpush1.bf16.msra.mxu0 0
    %1085 = vmatprep.subr.bf16.mxu0 0
    %1086 = vmatpush1.bf16.msra.mxu0 0
    %1087 = vmatprep.subr.bf16.mxu0 0
    %1088 = vmatpush1.bf16.msra.mxu0 0
    %1089 = vmatprep.subr.bf16.mxu0 0
    %1090 = vmatpush1.bf16.msra.mxu0 0
    %1091 = vmatprep.subr.bf16.mxu0 0
    %1092 = vmatpush1.bf16.msra.mxu0 0
    %1093 = vmatprep.subr.bf16.mxu0 0
    %1094 = vmatpush1.bf16.msra.mxu0 0
    %1095 = vmatprep.subr.bf16.mxu0 0
    %1096 = vmatpush1.bf16.msra.mxu0 0
    %1097 = vmatprep.subr.bf16.mxu0 0
    %1098 = vmatpush1.bf16.msra.mxu0 0
    %1099 = vmatprep.subr.bf16.mxu0 0
    %1100 = vmatpush1.bf16.msra.mxu0 0
    %1101 = vmatprep.subr.bf16.mxu0 0
    %1102 = vmatpush1.bf16.msra.mxu0 0
    %1103 = vmatprep.subr.bf16.mxu0 0
    %1104 = vmatpush1.bf16.msra.mxu0 0
    %1105 = vmatprep.subr.bf16.mxu0 0
    %1106 = vmatpush1.bf16.msra.mxu0 0
    %1107 = vmatprep.subr.bf16.mxu0 0
    %1108 = vmatpush1.bf16.msra.mxu0 0
    %1109 = vmatprep.subr.bf16.mxu0 0
    %1110 = vmatpush1.bf16.msra.mxu0 0
    %1111 = vmatprep.subr.bf16.mxu0 0
    %1112 = vmatpush1.bf16.msra.mxu0 0
    %1113 = vmatprep.mubr.bf16.mxu0 0
    %1114 = vmatmul.mubr.bf16.gmra.mrb[0].mxu0 %v1076
    %v1115 = vpop.f32.mrb[0].mxu0
    %v1116 = vadd.f32 0.0, %v1115
    %v1117 = vpop.f32.mrb[0].mxu0
    %v1118 = vpop.f32.mrb[0].mxu0
    %v1119 = vpop.f32.mrb[0].mxu0
    %1120 = vdwg.mxu0
    %v1121 = vrcp.pop %v1017
    %v1122 = vrcp.pop %v1020
    %v1123 = vmul.f32 %v1067, %v1121
    %v1124 = vmul.f32 %v1116, %v1122
    %v1125 = vpack.c.bf16 %v1124, %v1123
    %1127 = vrot.lane.b32.xlu0 %v1125, 64
    %v1128 = vpop.permute.xlu0 %1127
    %vm1130 = vcmask 1048064
    %1131 = vst.msk [vmem:[#allocation2] sm:$0xff] %vm1130, %v1128
    %v1132 = vld [vmem:[#allocation2] sm:$0xff]
    %v1133 = vld [vmem:[#allocation14] sm:$0xf]
    %v1134 = vld [vmem:[#allocation14 + $0x4] sm:$0xf]
    %v1135 = vld [vmem:[#allocation14 + $0x8] sm:$0xf]
    %v1136 = vld [vmem:[#allocation14 + $0xc] sm:$0xf]
    %v1137 = vld [vmem:[#allocation14 + $0x10] sm:$0xf]
    %v1138 = vld [vmem:[#allocation14 + $0x14] sm:$0xf]
    %v1139 = vld [vmem:[#allocation14 + $0x18] sm:$0xf]
    %v1140 = vld [vmem:[#allocation14 + $0x1c] sm:$0xf]
    %v1141 = vld [vmem:[#allocation14 + $0x20] sm:$0xf]
    %v1142 = vld [vmem:[#allocation14 + $0x24] sm:$0xf]
    %v1143 = vld [vmem:[#allocation14 + $0x28] sm:$0xf]
    %v1144 = vld [vmem:[#allocation14 + $0x2c] sm:$0xf]
    %v1145 = vld [vmem:[#allocation14 + $0x30] sm:$0xf]
    %v1146 = vld [vmem:[#allocation14 + $0x34] sm:$0xf]
    %v1147 = vld [vmem:[#allocation14 + $0x38] sm:$0xf]
    %v1148 = vld [vmem:[#allocation14 + $0x3c] sm:$0xf]
    %v1149 = vld [vmem:[%s7] sm:$0x1]
    %v1151 = vlaneseq
    %v1152 = vshrl.u32 %v1151, 7
    %v1153 = vsub.s32 0, %v1152
    %v1154 = vrot.slane %v1149, %v1153
    %v1172 = vunpack.c.l.b16 %v1133
    %v1173 = vunpack.c.l.b16 %v1134
    %v1174 = vunpack.c.l.b16 %v1135
    %v1175 = vunpack.c.l.b16 %v1136
    %v1176 = vunpack.c.l.b16 %v1137
    %v1177 = vunpack.c.l.b16 %v1138
    %v1178 = vunpack.c.l.b16 %v1139
    %v1179 = vunpack.c.l.b16 %v1140
    %v1180 = vunpack.c.l.b16 %v1141
    %v1181 = vunpack.c.l.b16 %v1142
    %v1182 = vunpack.c.l.b16 %v1143
    %v1183 = vunpack.c.l.b16 %v1144
    %v1184 = vunpack.c.l.b16 %v1145
    %v1185 = vunpack.c.l.b16 %v1146
    %v1186 = vunpack.c.l.b16 %v1147
    %v1187 = vunpack.c.l.b16 %v1148
    %v1188 = vpack.c.b16 %v1173, %v1172
    %v1189 = vpack.c.b16 %v1175, %v1174
    %v1190 = vpack.c.b16 %v1177, %v1176
    %v1191 = vpack.c.b16 %v1179, %v1178
    %v1192 = vpack.c.b16 %v1181, %v1180
    %v1193 = vpack.c.b16 %v1183, %v1182
    %v1194 = vpack.c.b16 %v1185, %v1184
    %v1195 = vpack.c.b16 %v1187, %v1186
    %1204 = vmatprep.subr.bf16.mxu0 0
    %1205 = vmatpush1.bf16.msra.mxu0 %v1188
    %1206 = vmatprep.subr.bf16.mxu0 0
    %1207 = vmatpush1.bf16.msra.mxu0 %v1189
    %1208 = vmatprep.subr.bf16.mxu0 0
    %1209 = vmatpush1.bf16.msra.mxu0 %v1190
    %1210 = vmatprep.subr.bf16.mxu0 0
    %1211 = vmatpush1.bf16.msra.mxu0 %v1191
    %1212 = vmatprep.subr.bf16.mxu0 0
    %1213 = vmatpush1.bf16.msra.mxu0 %v1192
    %1214 = vmatprep.subr.bf16.mxu0 0
    %1215 = vmatpush1.bf16.msra.mxu0 %v1193
    %1216 = vmatprep.subr.bf16.mxu0 0
    %1217 = vmatpush1.bf16.msra.mxu0 %v1194
    %1218 = vmatprep.subr.bf16.mxu0 0
    %1219 = vmatpush1.bf16.msra.mxu0 %v1195
    %1220 = vmatprep.subr.bf16.mxu0 0
    %1221 = vmatpush1.bf16.msra.mxu0 0
    %1222 = vmatprep.subr.bf16.mxu0 0
    %1223 = vmatpush1.bf16.msra.mxu0 0
    %1224 = vmatprep.subr.bf16.mxu0 0
    %1225 = vmatpush1.bf16.msra.mxu0 0
    %1226 = vmatprep.subr.bf16.mxu0 0
    %1227 = vmatpush1.bf16.msra.mxu0 0
    %1228 = vmatprep.subr.bf16.mxu0 0
    %1229 = vmatpush1.bf16.msra.mxu0 0
    %1230 = vmatprep.subr.bf16.mxu0 0
    %1231 = vmatpush1.bf16.msra.mxu0 0
    %1232 = vmatprep.subr.bf16.mxu0 0
    %1233 = vmatpush1.bf16.msra.mxu0 0
    %1234 = vmatprep.subr.bf16.mxu0 0
    %1235 = vmatpush1.bf16.msra.mxu0 0
    %1236 = vmatprep.mubr.bf16.mxu0 0
    %1237 = vmatmul.mubr.bf16.gmra.mrb[0].mxu0 %v1132
    %v1238 = vpop.f32.mrb[0].mxu0
    %v1239 = vadd.f32 %v1154, %v1238
    %v1240 = vpop.f32.mrb[0].mxu0
    %v1241 = vpop.f32.mrb[0].mxu0
    %v1242 = vadd.f32 %v1154, %v1241
    %v1243 = vpop.f32.mrb[0].mxu0
    %1244 = vdwg.mxu0
    %1245 = vst [vmem:[#allocation15] sm:$0xff] %v1239
    %1246 = vst [vmem:[#allocation15 + $0x8] sm:$0xff] %v1242
    // Predicated region
    $region62: #{tpu_custom_call.1} parent=1 // pred_check
      _
    $region63: #{tpu_custom_call.1} parent=1 // pred_check_branch
      %1248 = sbr.rel (0) target = $region65
    $region64: #{tpu_custom_call.1} parent=1 // pred_region
      %s1250 = ssub.s32 256, 256
      %1251 = vsyncadd [#allocation5], %s1250
      %s1252 = sshll.u32 [#allocation15], 4
      %s1253 = int_to_ptr.vmem [resolvable:$true] %s1252
      %1258 = dma.vmem_to_hbm [thread:$0]  %s1253, 256, %s8, [#allocation5], 128, 128, 8
    $region65: #{tpu_custom_call.1} parent=1 // pred_fallthru
      _
    // Predicated region
    $region66: #{tpu_custom_call.1} parent=1 // pred_check
      _
    $region67: #{tpu_custom_call.1} parent=1 // pred_check_branch
      %1260 = sbr.rel (0) target = $region69
    $region68: #{tpu_custom_call.1} parent=1 // pred_region
      %1261 = dma.done [#allocation5], 256
    $region69: #{tpu_custom_call.1} parent=1 // pred_fallthru
      _
    %1262 = vsyncpa [#allocation4], 1
    %1263 = vsyncpa [#allocation7], 1
    %1264 = vsyncpa [#allocation10], 1
    %1265 = vsyncpa [#allocation13], 1
    %1266 = vsyncpa [#allocation5], 1

</llo_original>
